<compile_context>
chip_gen: v7x
topology: tpu7x:2x2x1
jax: 0.10.0
libtpu: 0.0.40
codegen_flags: <defaults>
</compile_context>

<pallas_src>
import jax
import jax.numpy as jnp
from jax.experimental import pallas as pl
from jax.experimental.pallas import tpu as pltpu


def _resblock_kernel(x_ref, w1t_ref, b1_ref, scale_ref, shift_ref,
                     w2t_ref, b2_ref, o_ref):
    x = x_ref[...]                                             # (tm, d_in)

    # fc1: x @ W1^T + b1   (W1 is passed pre-transposed -> plain x @ w1t)
    h = jnp.dot(x, w1t_ref[...], preferred_element_type=jnp.float32)
    h = h + b1_ref[...]

    # bn1 (inference): per-feature scale/shift folded in the wrapper.
    h = h * scale_ref[...] + shift_ref[...]

    # relu
    h = jnp.maximum(h, 0.0)

    # fc2: h @ W2^T + b2
    y = jnp.dot(h, w2t_ref[...], preferred_element_type=jnp.float32)
    y = y + b2_ref[...]

    # residual add
    o_ref[...] = (x + y).astype(o_ref.dtype)


def _round_up(n, m):
    return ((n + m - 1) // m) * m


def resblock_forward(x, w1, b1, gamma, beta, running_mean, running_var,
                     w2, b2, *, eps=1e-5, tile_m=512):
    """Fused ResBlock forward. x: (N, in_dim); w1: (in_dim, in_dim);
    w2: (out_dim, in_dim) with out_dim == in_dim (required by the residual)."""
    N, d_in = x.shape
    d_out = w2.shape[0]
    assert d_out == d_in, "residual add requires out_dim == in_dim"

    f32 = jnp.float32

    # Fold BatchNorm (inference) into a per-feature scale + shift.
    scale = gamma / jnp.sqrt(running_var + eps)
    shift = beta - running_mean * scale
    scale_2d = scale.astype(f32).reshape(1, d_in)
    shift_2d = shift.astype(f32).reshape(1, d_in)

    w1t = w1.T.astype(f32)                       # (d_in, d_in)
    w2t = w2.T.astype(f32)                       # (d_in, d_out)
    b1_2d = b1.astype(f32).reshape(1, d_in)
    b2_2d = b2.astype(f32).reshape(1, d_out)

    xf = x.astype(f32)

    # Large row tiles (multiple of 8 sublanes); pad batch to a tile multiple.
    tm = min(tile_m, _round_up(N, 8))
    n_pad = _round_up(N, tm)
    if n_pad != N:
        xf = jnp.pad(xf, ((0, n_pad - N), (0, 0)))

    grid = (n_pad // tm,)

    row_spec = pl.BlockSpec((tm, d_in), lambda i: (i, 0))
    out_spec = pl.BlockSpec((tm, d_out), lambda i: (i, 0))

    def full(shape):
        return pl.BlockSpec(shape, lambda i: (0, 0))

    out = pl.pallas_call(
        _resblock_kernel,
        out_shape=jax.ShapeDtypeStruct((n_pad, d_out), f32),
        grid_spec=pltpu.PrefetchScalarGridSpec(
            num_scalar_prefetch=0,
            grid=grid,
            in_specs=[
                row_spec,               # x rows (tiled over batch)
                full((d_in, d_in)),     # W1^T (resident across grid steps)
                full((1, d_in)),        # b1
                full((1, d_in)),        # bn scale
                full((1, d_in)),        # bn shift
                full((d_in, d_out)),    # W2^T (resident across grid steps)
                full((1, d_out)),       # b2
            ],
            out_specs=out_spec,
        ),
        compiler_params=pltpu.CompilerParams(
            dimension_semantics=("parallel",),       # megacore split on v7x
        ),
    )(xf, w1t, b1_2d, scale_2d, shift_2d, w2t, b2_2d)

    return out[:N]


def _resblock_ref(x, w1, b1, gamma, beta, running_mean, running_var, w2, b2,
                  *, eps=1e-5):
    x = x.astype(jnp.float32)
    h = jnp.dot(x, w1.T, precision=jax.lax.Precision.HIGHEST) + b1
    h = (h - running_mean) / jnp.sqrt(running_var + eps) * gamma + beta
    h = jnp.maximum(h, 0.0)
    y = jnp.dot(h, w2.T, precision=jax.lax.Precision.HIGHEST) + b2
    return x + y


if __name__ == "__main__":
    jax.config.update("jax_default_matmul_precision", "highest")

    key = jax.random.PRNGKey(0)
    ks = jax.random.split(key, 9)

    batch, in_dim, out_dim = 64, 32, 32   # residual requires out_dim == in_dim

    x = jax.random.normal(ks[0], (batch, in_dim), dtype=jnp.float32)
    w1 = 0.1 * jax.random.normal(ks[1], (in_dim, in_dim), dtype=jnp.float32)
    b1 = 0.1 * jax.random.normal(ks[2], (in_dim,), dtype=jnp.float32)
    gamma = 1.0 + 0.1 * jax.random.normal(ks[3], (in_dim,), dtype=jnp.float32)
    beta = 0.1 * jax.random.normal(ks[4], (in_dim,), dtype=jnp.float32)
    running_mean = 0.1 * jax.random.normal(ks[5], (in_dim,), dtype=jnp.float32)
    running_var = 0.5 + 0.5 * jnp.abs(
        jax.random.normal(ks[6], (in_dim,), dtype=jnp.float32))
    w2 = 0.1 * jax.random.normal(ks[7], (out_dim, in_dim), dtype=jnp.float32)
    b2 = 0.1 * jax.random.normal(ks[8], (out_dim,), dtype=jnp.float32)

    out = resblock_forward(x, w1, b1, gamma, beta, running_mean, running_var,
                           w2, b2)
    out = jax.block_until_ready(out)

    ref = _resblock_ref(x, w1, b1, gamma, beta, running_mean, running_var,
                        w2, b2)
    assert out.shape == ref.shape, (out.shape, ref.shape)
    assert jnp.allclose(out, ref, atol=1e-3, rtol=1e-3), (
        float(jnp.max(jnp.abs(out - ref))))

    print("KERNEL_OK")
</pallas_src>

<mosaic_0001>
module attributes {stable_mosaic.version = 11 : i64} {
  func.func @_resblock_kernel(%arg0: i32, %arg1: memref<64x32xf32, #tpu.memory_space<vmem>>, %arg2: memref<32x32xf32, #tpu.memory_space<vmem>>, %arg3: memref<1x32xf32, #tpu.memory_space<vmem>>, %arg4: memref<1x32xf32, #tpu.memory_space<vmem>>, %arg5: memref<1x32xf32, #tpu.memory_space<vmem>>, %arg6: memref<32x32xf32, #tpu.memory_space<vmem>>, %arg7: memref<1x32xf32, #tpu.memory_space<vmem>>, %arg8: memref<64x32xf32, #tpu.memory_space<vmem>>) attributes {dimension_semantics = [#tpu.dimension_semantics<parallel>], iteration_bounds = array<i64: 1>, scalar_prefetch = 0 : i64, scratch_operands = 0 : i64, tpu.core_type = #tpu.core_type<tc>, window_params = [{transform_indices = @transform_0, window_bounds = array<i64: 64, 32>}, {pipeline_mode = #tpu.pipeline_mode<synchronous>, transform_indices = @transform_1, window_bounds = array<i64: 32, 32>}, {pipeline_mode = #tpu.pipeline_mode<synchronous>, transform_indices = @transform_2, window_bounds = array<i64: 1, 32>}, {pipeline_mode = #tpu.pipeline_mode<synchronous>, transform_indices = @transform_3, window_bounds = array<i64: 1, 32>}, {pipeline_mode = #tpu.pipeline_mode<synchronous>, transform_indices = @transform_4, window_bounds = array<i64: 1, 32>}, {pipeline_mode = #tpu.pipeline_mode<synchronous>, transform_indices = @transform_5, window_bounds = array<i64: 32, 32>}, {pipeline_mode = #tpu.pipeline_mode<synchronous>, transform_indices = @transform_6, window_bounds = array<i64: 1, 32>}, {transform_indices = @transform_7, window_bounds = array<i64: 64, 32>}]} {
    %c0 = arith.constant 0 : index
    %c0_0 = arith.constant 0 : index
    %0 = vector.load %arg1[%c0, %c0_0] : memref<64x32xf32, #tpu.memory_space<vmem>>, vector<64x32xf32>
    %c0_1 = arith.constant 0 : index
    %c0_2 = arith.constant 0 : index
    %1 = vector.load %arg2[%c0_1, %c0_2] : memref<32x32xf32, #tpu.memory_space<vmem>>, vector<32x32xf32>
    %cst = arith.constant dense<0.000000e+00> : vector<64x32xf32>
    %2 = tpu.matmul %0, %1, %cst {dimension_numbers = #tpu.dot_dimension_numbers<[1], [0], [0], [1], [0, 0, 1, 1], [], []>, precision = #tpu.contract_precision<fp32>} : vector<64x32xf32>, vector<32x32xf32>, vector<64x32xf32> -> vector<64x32xf32>
    %c0_3 = arith.constant 0 : index
    %c0_4 = arith.constant 0 : index
    %3 = vector.load %arg3[%c0_3, %c0_4] : memref<1x32xf32, #tpu.memory_space<vmem>>, vector<1x32xf32>
    %4 = vector.broadcast %3 : vector<1x32xf32> to vector<64x32xf32>
    %5 = arith.addf %2, %4 : vector<64x32xf32>
    %c0_5 = arith.constant 0 : index
    %c0_6 = arith.constant 0 : index
    %6 = vector.load %arg4[%c0_5, %c0_6] : memref<1x32xf32, #tpu.memory_space<vmem>>, vector<1x32xf32>
    %7 = vector.broadcast %6 : vector<1x32xf32> to vector<64x32xf32>
    %8 = arith.mulf %5, %7 : vector<64x32xf32>
    %c0_7 = arith.constant 0 : index
    %c0_8 = arith.constant 0 : index
    %9 = vector.load %arg5[%c0_7, %c0_8] : memref<1x32xf32, #tpu.memory_space<vmem>>, vector<1x32xf32>
    %10 = vector.broadcast %9 : vector<1x32xf32> to vector<64x32xf32>
    %11 = arith.addf %8, %10 : vector<64x32xf32>
    %cst_9 = arith.constant 0.000000e+00 : f32
    %12 = vector.broadcast %cst_9 : f32 to vector<64x32xf32>
    %13 = arith.maximumf %11, %12 : vector<64x32xf32>
    %c0_10 = arith.constant 0 : index
    %c0_11 = arith.constant 0 : index
    %14 = vector.load %arg6[%c0_10, %c0_11] : memref<32x32xf32, #tpu.memory_space<vmem>>, vector<32x32xf32>
    %cst_12 = arith.constant dense<0.000000e+00> : vector<64x32xf32>
    %15 = tpu.matmul %13, %14, %cst_12 {dimension_numbers = #tpu.dot_dimension_numbers<[1], [0], [0], [1], [0, 0, 1, 1], [], []>, precision = #tpu.contract_precision<fp32>} : vector<64x32xf32>, vector<32x32xf32>, vector<64x32xf32> -> vector<64x32xf32>
    %c0_13 = arith.constant 0 : index
    %c0_14 = arith.constant 0 : index
    %16 = vector.load %arg7[%c0_13, %c0_14] : memref<1x32xf32, #tpu.memory_space<vmem>>, vector<1x32xf32>
    %17 = vector.broadcast %16 : vector<1x32xf32> to vector<64x32xf32>
    %18 = arith.addf %15, %17 : vector<64x32xf32>
    %19 = arith.addf %0, %18 : vector<64x32xf32>
    %c0_15 = arith.constant 0 : index
    %c0_16 = arith.constant 0 : index
    %20 = vector.load %arg8[%c0_15, %c0_16] : memref<64x32xf32, #tpu.memory_space<vmem>>, vector<64x32xf32>
    tpu.vector_store %arg8[%c0_15, %c0_16], %19 {strides = array<i32>} : memref<64x32xf32, #tpu.memory_space<vmem>>, vector<64x32xf32>,
    return
  }
  func.func @transform_0(%arg0: i32) -> (i32, i32) {
    %c0_i32 = arith.constant 0 : i32
    %c0_i32_0 = arith.constant 0 : i32
    return %arg0, %c0_i32 : i32, i32
  }
  func.func @transform_1(%arg0: i32) -> (i32, i32) {
    %c0_i32 = arith.constant 0 : i32
    %c0_i32_0 = arith.constant 0 : i32
    %c0_i32_1 = arith.constant 0 : i32
    return %c0_i32, %c0_i32_0 : i32, i32
  }
  func.func @transform_2(%arg0: i32) -> (i32, i32) {
    %c0_i32 = arith.constant 0 : i32
    %c0_i32_0 = arith.constant 0 : i32
    %c0_i32_1 = arith.constant 0 : i32
    return %c0_i32, %c0_i32_0 : i32, i32
  }
  func.func @transform_3(%arg0: i32) -> (i32, i32) {
    %c0_i32 = arith.constant 0 : i32
    %c0_i32_0 = arith.constant 0 : i32
    %c0_i32_1 = arith.constant 0 : i32
    return %c0_i32, %c0_i32_0 : i32, i32
  }
  func.func @transform_4(%arg0: i32) -> (i32, i32) {
    %c0_i32 = arith.constant 0 : i32
    %c0_i32_0 = arith.constant 0 : i32
    %c0_i32_1 = arith.constant 0 : i32
    return %c0_i32, %c0_i32_0 : i32, i32
  }
  func.func @transform_5(%arg0: i32) -> (i32, i32) {
    %c0_i32 = arith.constant 0 : i32
    %c0_i32_0 = arith.constant 0 : i32
    %c0_i32_1 = arith.constant 0 : i32
    return %c0_i32, %c0_i32_0 : i32, i32
  }
  func.func @transform_6(%arg0: i32) -> (i32, i32) {
    %c0_i32 = arith.constant 0 : i32
    %c0_i32_0 = arith.constant 0 : i32
    %c0_i32_1 = arith.constant 0 : i32
    return %c0_i32, %c0_i32_0 : i32, i32
  }
  func.func @transform_7(%arg0: i32) -> (i32, i32) {
    %c0_i32 = arith.constant 0 : i32
    %c0_i32_0 = arith.constant 0 : i32
    return %arg0, %c0_i32 : i32, i32
  }
}

</mosaic_0001>

<llo_original>
// kernel: tpu_custom_call.1
$region0: #{tpu_custom_call.1}
  #allocation0 [shape = 'u32[]', space=smem, size = 0x4, offset = 0x4, fixed_abs, tag = 'smem constant byte address 0x4 - core index']
  #allocation1 [shape = 'u32[144,128]{1,0:T(1,128)}', space=vmem, size = 0x12000, scoped, tag = 'internal scratch']
  %s0 = inlined_call_operand.vmem [shape: f32[64,32], index: 0, kind: input, shape index: {}]
  %s1 = inlined_call_operand.vmem [shape: f32[32,32], index: 1, kind: input, shape index: {}]
  %s2 = inlined_call_operand.vmem [shape: f32[1,32], index: 2, kind: input, shape index: {}]
  %s3 = inlined_call_operand.vmem [shape: f32[1,32], index: 3, kind: input, shape index: {}]
  %s4 = inlined_call_operand.vmem [shape: f32[1,32], index: 4, kind: input, shape index: {}]
  %s5 = inlined_call_operand.vmem [shape: f32[32,32], index: 5, kind: input, shape index: {}]
  %s6 = inlined_call_operand.vmem [shape: f32[1,32], index: 6, kind: input, shape index: {}]
  %s7 = inlined_call_operand.vmem [shape: f32[64,32], index: 7, kind: output, shape index: {}]
  %s8 = sld [smem:[#allocation0]]
  $region38: #{tpu_custom_call.1} parent=0
    _
  %s10 = ssub.s32 1, %s8
  %s11 = scalar_select 0, %s10, %s8
  // Predicated region
  $region2: #{tpu_custom_call.1} parent=0 // pred_check
    _
  $region3: #{tpu_custom_call.1} parent=0 // pred_check_branch
    %13 = sbr.rel (0) target = $region5
  $region4: #{tpu_custom_call.1} parent=0 // pred_region
    _
  $region5: #{tpu_custom_call.1} parent=0 // pred_fallthru
    _
  // Predicated region
  $region6: #{tpu_custom_call.1} parent=0 // pred_check
    _
  $region7: #{tpu_custom_call.1} parent=0 // pred_check_branch
    %15 = sbr.rel (0) target = $region9
  $region8: #{tpu_custom_call.1} parent=0 // pred_region
    _
  $region9: #{tpu_custom_call.1} parent=0 // pred_fallthru
    _
  // Predicated region
  $region10: #{tpu_custom_call.1} parent=0 // pred_check
    _
  $region11: #{tpu_custom_call.1} parent=0 // pred_check_branch
    %17 = sbr.rel (0) target = $region13
  $region12: #{tpu_custom_call.1} parent=0 // pred_region
    _
  $region13: #{tpu_custom_call.1} parent=0 // pred_fallthru
    _
  // Predicated region
  $region14: #{tpu_custom_call.1} parent=0 // pred_check
    _
  $region15: #{tpu_custom_call.1} parent=0 // pred_check_branch
    %19 = sbr.rel (0) target = $region17
  $region16: #{tpu_custom_call.1} parent=0 // pred_region
    _
  $region17: #{tpu_custom_call.1} parent=0 // pred_fallthru
    _
  // Predicated region
  $region18: #{tpu_custom_call.1} parent=0 // pred_check
    _
  $region19: #{tpu_custom_call.1} parent=0 // pred_check_branch
    %21 = sbr.rel (0) target = $region21
  $region20: #{tpu_custom_call.1} parent=0 // pred_region
    _
  $region21: #{tpu_custom_call.1} parent=0 // pred_fallthru
    _
  // Predicated region
  $region22: #{tpu_custom_call.1} parent=0 // pred_check
    _
  $region23: #{tpu_custom_call.1} parent=0 // pred_check_branch
    %23 = sbr.rel (0) target = $region25
  $region24: #{tpu_custom_call.1} parent=0 // pred_region
    _
  $region25: #{tpu_custom_call.1} parent=0 // pred_fallthru
    _
  // Predicated region
  $region26: #{tpu_custom_call.1} parent=0 // pred_check
    _
  $region27: #{tpu_custom_call.1} parent=0 // pred_check_branch
    %25 = sbr.rel (0) target = $region29
  $region28: #{tpu_custom_call.1} parent=0 // pred_region
    _
  $region29: #{tpu_custom_call.1} parent=0 // pred_fallthru
    _
  %v26 = vld [vmem:[%s0] sm:$0xff]
  %v27 = vld [vmem:[%s0 + $0x8] sm:$0xff]
  %v28 = vld [vmem:[%s0 + $0x10] sm:$0xff]
  %v29 = vld [vmem:[%s0 + $0x18] sm:$0xff]
  %v30 = vld [vmem:[%s0 + $0x20] sm:$0xff]
  %v31 = vld [vmem:[%s0 + $0x28] sm:$0xff]
  %v32 = vld [vmem:[%s0 + $0x30] sm:$0xff]
  %v33 = vld [vmem:[%s0 + $0x38] sm:$0xff]
  %v34 = vld [vmem:[%s1] sm:$0xff]
  %v35 = vld [vmem:[%s1 + $0x8] sm:$0xff]
  %v36 = vld [vmem:[%s1 + $0x10] sm:$0xff]
  %v37 = vld [vmem:[%s1 + $0x18] sm:$0xff]
  %v38 = vld [vmem:[%s2] sm:$0x1]
  %v40 = vlaneseq
  %v41 = vshrl.u32 %v40, 7
  %v42 = vsub.s32 0, %v41
  %v43 = vrot.slane %v38, %v42
  %vm45 = vcmask 261120
  %v47 = vsel %vm45, %v26, 0
  %v50 = vsel %vm45, %v27, 0
  %v53 = vsel %vm45, %v28, 0
  %v56 = vsel %vm45, %v29, 0
  %v59 = vsel %vm45, %v30, 0
  %v62 = vsel %vm45, %v31, 0
  %v65 = vsel %vm45, %v32, 0
  %v68 = vsel %vm45, %v33, 0
  %70 = vmatprep.subr.mxu0 0.0
  %v71 = vand.u32 %v34, 4294901760
  %72 = vmatpush1.msra.mxu0 %v71
  %73 = vmatprep.subr.mxu0 0.0
  %v74 = vand.u32 %v35, 4294901760
  %75 = vmatpush1.msra.mxu0 %v74
  %76 = vmatprep.subr.mxu0 0.0
  %v77 = vand.u32 %v36, 4294901760
  %78 = vmatpush1.msra.mxu0 %v77
  %79 = vmatprep.subr.mxu0 0.0
  %v80 = vand.u32 %v37, 4294901760
  %81 = vmatpush1.msra.mxu0 %v80
  %82 = vmatprep.subr.mxu0 0.0
  %83 = vmatpush1.msra.mxu0 0.0
  %84 = vmatprep.subr.mxu0 0.0
  %85 = vmatpush1.msra.mxu0 0.0
  %86 = vmatprep.subr.mxu0 0.0
  %87 = vmatpush1.msra.mxu0 0.0
  %88 = vmatprep.subr.mxu0 0.0
  %89 = vmatpush1.msra.mxu0 0.0
  %90 = vmatprep.subr.mxu0 0.0
  %91 = vmatpush1.msra.mxu0 0.0
  %92 = vmatprep.subr.mxu0 0.0
  %93 = vmatpush1.msra.mxu0 0.0
  %94 = vmatprep.subr.mxu0 0.0
  %95 = vmatpush1.msra.mxu0 0.0
  %96 = vmatprep.subr.mxu0 0.0
  %97 = vmatpush1.msra.mxu0 0.0
  %98 = vmatprep.subr.mxu0 0.0
  %99 = vmatpush1.msra.mxu0 0.0
  %100 = vmatprep.subr.mxu0 0.0
  %101 = vmatpush1.msra.mxu0 0.0
  %102 = vmatprep.subr.mxu0 0.0
  %103 = vmatpush1.msra.mxu0 0.0
  %104 = vmatprep.subr.mxu0 0.0
  %105 = vmatpush1.msra.mxu0 0.0
  %106 = vmatprep.subr.mxu0 0.0
  %107 = vmatpush1.msra.mxu0 0.0
  %108 = vmatprep.subr.mxu0 0.0
  %109 = vmatpush1.msra.mxu0 0.0
  %110 = vmatprep.subr.mxu0 0.0
  %111 = vmatpush1.msra.mxu0 0.0
  %112 = vmatprep.subr.mxu0 0.0
  %113 = vmatpush1.msra.mxu0 0.0
  %114 = vmatprep.subr.mxu0 0.0
  %115 = vmatpush1.msra.mxu0 0.0
  %116 = vmatprep.subr.mxu0 0.0
  %117 = vmatpush1.msra.mxu0 0.0
  %118 = vmatprep.subr.mxu0 0.0
  %119 = vmatpush1.msra.mxu0 0.0
  %120 = vmatprep.subr.mxu0 0.0
  %121 = vmatpush1.msra.mxu0 0.0
  %122 = vmatprep.subr.mxu0 0.0
  %123 = vmatpush1.msra.mxu0 0.0
  %124 = vmatprep.subr.mxu0 0.0
  %125 = vmatpush1.msra.mxu0 0.0
  %126 = vmatprep.subr.mxu0 0.0
  %127 = vmatpush1.msra.mxu0 0.0
  %128 = vmatprep.subr.mxu0 0.0
  %129 = vmatpush1.msra.mxu0 0.0
  %130 = vmatprep.subr.mxu0 0.0
  %131 = vmatpush1.msra.mxu0 0.0
  %132 = vmatprep.subr.mxu0 0.0
  %133 = vmatpush1.msra.mxu0 0.0
  %134 = vmatprep.subr.mxu0 0.0
  %135 = vmatpush1.msra.mxu0 0.0
  %136 = vmatprep.subr.mxu0 0.0
  %137 = vmatpush1.msra.mxu0 0.0
  %138 = vmatprep.mubr.f32.mxu0 0.0
  %v139 = vand.u32 %v47, 4294901760
  %v140 = vsub.f32 %v47, %v139
  %v141 = vand.u32 %v140, 4294901760
  %v142 = vsub.f32 %v140, %v141
  %v143 = vand.u32 %v142, 4294901760
  %144 = vmatmul.mubr.f32.gmra.mrb[0].mxu0 %v143
  %v145 = vpop.f32.mrb[0].mxu0
  %v146 = vadd.f32 %v43, %v145
  %v147 = vpop.f32.mrb[0].mxu0
  %148 = vmatprep.mubr.f32.mxu0 0.0
  %v149 = vand.u32 %v50, 4294901760
  %v150 = vsub.f32 %v50, %v149
  %v151 = vand.u32 %v150, 4294901760
  %v152 = vsub.f32 %v150, %v151
  %v153 = vand.u32 %v152, 4294901760
  %154 = vmatmul.mubr.f32.gmra.mrb[0].mxu0 %v153
  %v155 = vpop.f32.mrb[0].mxu0
  %v156 = vadd.f32 %v43, %v155
  %v157 = vpop.f32.mrb[0].mxu0
  %158 = vmatprep.mubr.f32.mxu0 0.0
  %v159 = vand.u32 %v53, 4294901760
  %v160 = vsub.f32 %v53, %v159
  %v161 = vand.u32 %v160, 4294901760
  %v162 = vsub.f32 %v160, %v161
  %v163 = vand.u32 %v162, 4294901760
  %164 = vmatmul.mubr.f32.gmra.mrb[0].mxu0 %v163
  %v165 = vpop.f32.mrb[0].mxu0
  %v166 = vadd.f32 %v43, %v165
  %v167 = vpop.f32.mrb[0].mxu0
  %168 = vmatprep.mubr.f32.mxu0 0.0
  %v169 = vand.u32 %v56, 4294901760
  %v170 = vsub.f32 %v56, %v169
  %v171 = vand.u32 %v170, 4294901760
  %v172 = vsub.f32 %v170, %v171
  %v173 = vand.u32 %v172, 4294901760
  %174 = vmatmul.mubr.f32.gmra.mrb[0].mxu0 %v173
  %v175 = vpop.f32.mrb[0].mxu0
  %v176 = vadd.f32 %v43, %v175
  %v177 = vpop.f32.mrb[0].mxu0
  %178 = vmatprep.mubr.f32.mxu0 0.0
  %v179 = vand.u32 %v59, 4294901760
  %v180 = vsub.f32 %v59, %v179
  %v181 = vand.u32 %v180, 4294901760
  %v182 = vsub.f32 %v180, %v181
  %v183 = vand.u32 %v182, 4294901760
  %184 = vmatmul.mubr.f32.gmra.mrb[0].mxu0 %v183
  %v185 = vpop.f32.mrb[0].mxu0
  %v186 = vadd.f32 %v43, %v185
  %v187 = vpop.f32.mrb[0].mxu0
  %188 = vmatprep.mubr.f32.mxu0 0.0
  %v189 = vand.u32 %v62, 4294901760
  %v190 = vsub.f32 %v62, %v189
  %v191 = vand.u32 %v190, 4294901760
  %v192 = vsub.f32 %v190, %v191
  %v193 = vand.u32 %v192, 4294901760
  %194 = vmatmul.mubr.f32.gmra.mrb[0].mxu0 %v193
  %v195 = vpop.f32.mrb[0].mxu0
  %v196 = vadd.f32 %v43, %v195
  %v197 = vpop.f32.mrb[0].mxu0
  %198 = vmatprep.mubr.f32.mxu0 0.0
  %v199 = vand.u32 %v65, 4294901760
  %v200 = vsub.f32 %v65, %v199
  %v201 = vand.u32 %v200, 4294901760
  %v202 = vsub.f32 %v200, %v201
  %v203 = vand.u32 %v202, 4294901760
  %204 = vmatmul.mubr.f32.gmra.mrb[0].mxu0 %v203
  %v205 = vpop.f32.mrb[0].mxu0
  %v206 = vadd.f32 %v43, %v205
  %v207 = vpop.f32.mrb[0].mxu0
  %208 = vmatprep.mubr.f32.mxu0 0.0
  %v209 = vand.u32 %v68, 4294901760
  %v210 = vsub.f32 %v68, %v209
  %v211 = vand.u32 %v210, 4294901760
  %v212 = vsub.f32 %v210, %v211
  %v213 = vand.u32 %v212, 4294901760
  %214 = vmatmul.mubr.f32.gmra.mrb[0].mxu0 %v213
  %v215 = vpop.f32.mrb[0].mxu0
  %v216 = vadd.f32 %v43, %v215
  %v217 = vpop.f32.mrb[0].mxu0
  %218 = vdwg.mxu0
  %219 = vmatprep.subr.mxu0 0.0
  %v220 = vand.u32 %v34, 4294901760
  %v221 = vsub.f32 %v34, %v220
  %v222 = vand.u32 %v221, 4294901760
  %v223 = vsub.f32 %v221, %v222
  %v224 = vand.u32 %v223, 4294901760
  %225 = vmatpush1.msra.mxu0 %v224
  %226 = vmatprep.subr.mxu0 0.0
  %v227 = vand.u32 %v35, 4294901760
  %v228 = vsub.f32 %v35, %v227
  %v229 = vand.u32 %v228, 4294901760
  %v230 = vsub.f32 %v228, %v229
  %v231 = vand.u32 %v230, 4294901760
  %232 = vmatpush1.msra.mxu0 %v231
  %233 = vmatprep.subr.mxu0 0.0
  %v234 = vand.u32 %v36, 4294901760
  %v235 = vsub.f32 %v36, %v234
  %v236 = vand.u32 %v235, 4294901760
  %v237 = vsub.f32 %v235, %v236
  %v238 = vand.u32 %v237, 4294901760
  %239 = vmatpush1.msra.mxu0 %v238
  %240 = vmatprep.subr.mxu0 0.0
  %v241 = vand.u32 %v37, 4294901760
  %v242 = vsub.f32 %v37, %v241
  %v243 = vand.u32 %v242, 4294901760
  %v244 = vsub.f32 %v242, %v243
  %v245 = vand.u32 %v244, 4294901760
  %246 = vmatpush1.msra.mxu0 %v245
  %247 = vmatprep.subr.mxu0 0.0
  %248 = vmatpush1.msra.mxu0 0.0
  %249 = vmatprep.subr.mxu0 0.0
  %250 = vmatpush1.msra.mxu0 0.0
  %251 = vmatprep.subr.mxu0 0.0
  %252 = vmatpush1.msra.mxu0 0.0
  %253 = vmatprep.subr.mxu0 0.0
  %254 = vmatpush1.msra.mxu0 0.0
  %255 = vmatprep.subr.mxu0 0.0
  %256 = vmatpush1.msra.mxu0 0.0
  %257 = vmatprep.subr.mxu0 0.0
  %258 = vmatpush1.msra.mxu0 0.0
  %259 = vmatprep.subr.mxu0 0.0
  %260 = vmatpush1.msra.mxu0 0.0
  %261 = vmatprep.subr.mxu0 0.0
  %262 = vmatpush1.msra.mxu0 0.0
  %263 = vmatprep.subr.mxu0 0.0
  %264 = vmatpush1.msra.mxu0 0.0
  %265 = vmatprep.subr.mxu0 0.0
  %266 = vmatpush1.msra.mxu0 0.0
  %267 = vmatprep.subr.mxu0 0.0
  %268 = vmatpush1.msra.mxu0 0.0
  %269 = vmatprep.subr.mxu0 0.0
  %270 = vmatpush1.msra.mxu0 0.0
  %271 = vmatprep.subr.mxu0 0.0
  %272 = vmatpush1.msra.mxu0 0.0
  %273 = vmatprep.subr.mxu0 0.0
  %274 = vmatpush1.msra.mxu0 0.0
  %275 = vmatprep.subr.mxu0 0.0
  %276 = vmatpush1.msra.mxu0 0.0
  %277 = vmatprep.subr.mxu0 0.0
  %278 = vmatpush1.msra.mxu0 0.0
  %279 = vmatprep.subr.mxu0 0.0
  %280 = vmatpush1.msra.mxu0 0.0
  %281 = vmatprep.subr.mxu0 0.0
  %282 = vmatpush1.msra.mxu0 0.0
  %283 = vmatprep.subr.mxu0 0.0
  %284 = vmatpush1.msra.mxu0 0.0
  %285 = vmatprep.subr.mxu0 0.0
  %286 = vmatpush1.msra.mxu0 0.0
  %287 = vmatprep.subr.mxu0 0.0
  %288 = vmatpush1.msra.mxu0 0.0
  %289 = vmatprep.subr.mxu0 0.0
  %290 = vmatpush1.msra.mxu0 0.0
  %291 = vmatprep.subr.mxu0 0.0
  %292 = vmatpush1.msra.mxu0 0.0
  %293 = vmatprep.subr.mxu0 0.0
  %294 = vmatpush1.msra.mxu0 0.0
  %295 = vmatprep.subr.mxu0 0.0
  %296 = vmatpush1.msra.mxu0 0.0
  %297 = vmatprep.subr.mxu0 0.0
  %298 = vmatpush1.msra.mxu0 0.0
  %299 = vmatprep.subr.mxu0 0.0
  %300 = vmatpush1.msra.mxu0 0.0
  %301 = vmatprep.subr.mxu0 0.0
  %302 = vmatpush1.msra.mxu0 0.0
  %303 = vmatprep.mubr.f32.mxu0 0.0
  %v304 = vand.u32 %v47, 4294901760
  %305 = vmatmul.mubr.f32.gmra.mrb[0].mxu0 %v304
  %v306 = vpop.f32.mrb[0].mxu0
  %v307 = vadd.f32 %v146, %v306
  %v308 = vpop.f32.mrb[0].mxu0
  %309 = vmatprep.mubr.f32.mxu0 0.0
  %v310 = vand.u32 %v50, 4294901760
  %311 = vmatmul.mubr.f32.gmra.mrb[0].mxu0 %v310
  %v312 = vpop.f32.mrb[0].mxu0
  %v313 = vadd.f32 %v156, %v312
  %v314 = vpop.f32.mrb[0].mxu0
  %315 = vmatprep.mubr.f32.mxu0 0.0
  %v316 = vand.u32 %v53, 4294901760
  %317 = vmatmul.mubr.f32.gmra.mrb[0].mxu0 %v316
  %v318 = vpop.f32.mrb[0].mxu0
  %v319 = vadd.f32 %v166, %v318
  %v320 = vpop.f32.mrb[0].mxu0
  %321 = vmatprep.mubr.f32.mxu0 0.0
  %v322 = vand.u32 %v56, 4294901760
  %323 = vmatmul.mubr.f32.gmra.mrb[0].mxu0 %v322
  %v324 = vpop.f32.mrb[0].mxu0
  %v325 = vadd.f32 %v176, %v324
  %v326 = vpop.f32.mrb[0].mxu0
  %327 = vmatprep.mubr.f32.mxu0 0.0
  %v328 = vand.u32 %v59, 4294901760
  %329 = vmatmul.mubr.f32.gmra.mrb[0].mxu0 %v328
  %v330 = vpop.f32.mrb[0].mxu0
  %v331 = vadd.f32 %v186, %v330
  %v332 = vpop.f32.mrb[0].mxu0
  %333 = vmatprep.mubr.f32.mxu0 0.0
  %v334 = vand.u32 %v62, 4294901760
  %335 = vmatmul.mubr.f32.gmra.mrb[0].mxu0 %v334
  %v336 = vpop.f32.mrb[0].mxu0
  %v337 = vadd.f32 %v196, %v336
  %v338 = vpop.f32.mrb[0].mxu0
  %339 = vmatprep.mubr.f32.mxu0 0.0
  %v340 = vand.u32 %v65, 4294901760
  %341 = vmatmul.mubr.f32.gmra.mrb[0].mxu0 %v340
  %v342 = vpop.f32.mrb[0].mxu0
  %v343 = vadd.f32 %v206, %v342
  %v344 = vpop.f32.mrb[0].mxu0
  %345 = vmatprep.mubr.f32.mxu0 0.0
  %v346 = vand.u32 %v68, 4294901760
  %347 = vmatmul.mubr.f32.gmra.mrb[0].mxu0 %v346
  %v348 = vpop.f32.mrb[0].mxu0
  %v349 = vadd.f32 %v216, %v348
  %v350 = vpop.f32.mrb[0].mxu0
  %351 = vdwg.mxu0
  %352 = vmatprep.subr.mxu0 0.0
  %v353 = vand.u32 %v34, 4294901760
  %v354 = vsub.f32 %v34, %v353
  %355 = vmatpush1.msra.mxu0 %v354
  %356 = vmatprep.subr.mxu0 0.0
  %v357 = vand.u32 %v35, 4294901760
  %v358 = vsub.f32 %v35, %v357
  %359 = vmatpush1.msra.mxu0 %v358
  %360 = vmatprep.subr.mxu0 0.0
  %v361 = vand.u32 %v36, 4294901760
  %v362 = vsub.f32 %v36, %v361
  %363 = vmatpush1.msra.mxu0 %v362
  %364 = vmatprep.subr.mxu0 0.0
  %v365 = vand.u32 %v37, 4294901760
  %v366 = vsub.f32 %v37, %v365
  %367 = vmatpush1.msra.mxu0 %v366
  %368 = vmatprep.subr.mxu0 0.0
  %369 = vmatpush1.msra.mxu0 0.0
  %370 = vmatprep.subr.mxu0 0.0
  %371 = vmatpush1.msra.mxu0 0.0
  %372 = vmatprep.subr.mxu0 0.0
  %373 = vmatpush1.msra.mxu0 0.0
  %374 = vmatprep.subr.mxu0 0.0
  %375 = vmatpush1.msra.mxu0 0.0
  %376 = vmatprep.subr.mxu0 0.0
  %377 = vmatpush1.msra.mxu0 0.0
  %378 = vmatprep.subr.mxu0 0.0
  %379 = vmatpush1.msra.mxu0 0.0
  %380 = vmatprep.subr.mxu0 0.0
  %381 = vmatpush1.msra.mxu0 0.0
  %382 = vmatprep.subr.mxu0 0.0
  %383 = vmatpush1.msra.mxu0 0.0
  %384 = vmatprep.subr.mxu0 0.0
  %385 = vmatpush1.msra.mxu0 0.0
  %386 = vmatprep.subr.mxu0 0.0
  %387 = vmatpush1.msra.mxu0 0.0
  %388 = vmatprep.subr.mxu0 0.0
  %389 = vmatpush1.msra.mxu0 0.0
  %390 = vmatprep.subr.mxu0 0.0
  %391 = vmatpush1.msra.mxu0 0.0
  %392 = vmatprep.subr.mxu0 0.0
  %393 = vmatpush1.msra.mxu0 0.0
  %394 = vmatprep.subr.mxu0 0.0
  %395 = vmatpush1.msra.mxu0 0.0
  %396 = vmatprep.subr.mxu0 0.0
  %397 = vmatpush1.msra.mxu0 0.0
  %398 = vmatprep.subr.mxu0 0.0
  %399 = vmatpush1.msra.mxu0 0.0
  %400 = vmatprep.subr.mxu0 0.0
  %401 = vmatpush1.msra.mxu0 0.0
  %402 = vmatprep.subr.mxu0 0.0
  %403 = vmatpush1.msra.mxu0 0.0
  %404 = vmatprep.subr.mxu0 0.0
  %405 = vmatpush1.msra.mxu0 0.0
  %406 = vmatprep.subr.mxu0 0.0
  %407 = vmatpush1.msra.mxu0 0.0
  %408 = vmatprep.subr.mxu0 0.0
  %409 = vmatpush1.msra.mxu0 0.0
  %410 = vmatprep.subr.mxu0 0.0
  %411 = vmatpush1.msra.mxu0 0.0
  %412 = vmatprep.subr.mxu0 0.0
  %413 = vmatpush1.msra.mxu0 0.0
  %414 = vmatprep.subr.mxu0 0.0
  %415 = vmatpush1.msra.mxu0 0.0
  %416 = vmatprep.subr.mxu0 0.0
  %417 = vmatpush1.msra.mxu0 0.0
  %418 = vmatprep.subr.mxu0 0.0
  %419 = vmatpush1.msra.mxu0 0.0
  %420 = vmatprep.subr.mxu0 0.0
  %421 = vmatpush1.msra.mxu0 0.0
  %422 = vmatprep.subr.mxu0 0.0
  %423 = vmatpush1.msra.mxu0 0.0
  %424 = vmatprep.mubr.f32.mxu0 0.0
  %v425 = vand.u32 %v47, 4294901760
  %v426 = vsub.f32 %v47, %v425
  %427 = vmatmul.mubr.f32.gmra.mrb[0].mxu0 %v426
  %v428 = vpop.f32.mrb[0].mxu0
  %v429 = vadd.f32 %v307, %v428
  %v430 = vpop.f32.mrb[0].mxu0
  %431 = vmatprep.mubr.f32.mxu0 0.0
  %v432 = vand.u32 %v50, 4294901760
  %v433 = vsub.f32 %v50, %v432
  %434 = vmatmul.mubr.f32.gmra.mrb[0].mxu0 %v433
  %v435 = vpop.f32.mrb[0].mxu0
  %v436 = vadd.f32 %v313, %v435
  %v437 = vpop.f32.mrb[0].mxu0
  %438 = vmatprep.mubr.f32.mxu0 0.0
  %v439 = vand.u32 %v53, 4294901760
  %v440 = vsub.f32 %v53, %v439
  %441 = vmatmul.mubr.f32.gmra.mrb[0].mxu0 %v440
  %v442 = vpop.f32.mrb[0].mxu0
  %v443 = vadd.f32 %v319, %v442
  %v444 = vpop.f32.mrb[0].mxu0
  %445 = vmatprep.mubr.f32.mxu0 0.0
  %v446 = vand.u32 %v56, 4294901760
  %v447 = vsub.f32 %v56, %v446
  %448 = vmatmul.mubr.f32.gmra.mrb[0].mxu0 %v447
  %v449 = vpop.f32.mrb[0].mxu0
  %v450 = vadd.f32 %v325, %v449
  %v451 = vpop.f32.mrb[0].mxu0
  %452 = vmatprep.mubr.f32.mxu0 0.0
  %v453 = vand.u32 %v59, 4294901760
  %v454 = vsub.f32 %v59, %v453
  %455 = vmatmul.mubr.f32.gmra.mrb[0].mxu0 %v454
  %v456 = vpop.f32.mrb[0].mxu0
  %v457 = vadd.f32 %v331, %v456
  %v458 = vpop.f32.mrb[0].mxu0
  %459 = vmatprep.mubr.f32.mxu0 0.0
  %v460 = vand.u32 %v62, 4294901760
  %v461 = vsub.f32 %v62, %v460
  %462 = vmatmul.mubr.f32.gmra.mrb[0].mxu0 %v461
  %v463 = vpop.f32.mrb[0].mxu0
  %v464 = vadd.f32 %v337, %v463
  %v465 = vpop.f32.mrb[0].mxu0
  %466 = vmatprep.mubr.f32.mxu0 0.0
  %v467 = vand.u32 %v65, 4294901760
  %v468 = vsub.f32 %v65, %v467
  %469 = vmatmul.mubr.f32.gmra.mrb[0].mxu0 %v468
  %v470 = vpop.f32.mrb[0].mxu0
  %v471 = vadd.f32 %v343, %v470
  %v472 = vpop.f32.mrb[0].mxu0
  %473 = vmatprep.mubr.f32.mxu0 0.0
  %v474 = vand.u32 %v68, 4294901760
  %v475 = vsub.f32 %v68, %v474
  %476 = vmatmul.mubr.f32.gmra.mrb[0].mxu0 %v475
  %v477 = vpop.f32.mrb[0].mxu0
  %v478 = vadd.f32 %v349, %v477
  %v479 = vpop.f32.mrb[0].mxu0
  %480 = vdwg.mxu0
  %481 = vmatprep.subr.mxu0 0.0
  %v482 = vand.u32 %v34, 4294901760
  %483 = vmatpush1.msra.mxu0 %v482
  %484 = vmatprep.subr.mxu0 0.0
  %v485 = vand.u32 %v35, 4294901760
  %486 = vmatpush1.msra.mxu0 %v485
  %487 = vmatprep.subr.mxu0 0.0
  %v488 = vand.u32 %v36, 4294901760
  %489 = vmatpush1.msra.mxu0 %v488
  %490 = vmatprep.subr.mxu0 0.0
  %v491 = vand.u32 %v37, 4294901760
  %492 = vmatpush1.msra.mxu0 %v491
  %493 = vmatprep.subr.mxu0 0.0
  %494 = vmatpush1.msra.mxu0 0.0
  %495 = vmatprep.subr.mxu0 0.0
  %496 = vmatpush1.msra.mxu0 0.0
  %497 = vmatprep.subr.mxu0 0.0
  %498 = vmatpush1.msra.mxu0 0.0
  %499 = vmatprep.subr.mxu0 0.0
  %500 = vmatpush1.msra.mxu0 0.0
  %501 = vmatprep.subr.mxu0 0.0
  %502 = vmatpush1.msra.mxu0 0.0
  %503 = vmatprep.subr.mxu0 0.0
  %504 = vmatpush1.msra.mxu0 0.0
  %505 = vmatprep.subr.mxu0 0.0
  %506 = vmatpush1.msra.mxu0 0.0
  %507 = vmatprep.subr.mxu0 0.0
  %508 = vmatpush1.msra.mxu0 0.0
  %509 = vmatprep.subr.mxu0 0.0
  %510 = vmatpush1.msra.mxu0 0.0
  %511 = vmatprep.subr.mxu0 0.0
  %512 = vmatpush1.msra.mxu0 0.0
  %513 = vmatprep.subr.mxu0 0.0
  %514 = vmatpush1.msra.mxu0 0.0
  %515 = vmatprep.subr.mxu0 0.0
  %516 = vmatpush1.msra.mxu0 0.0
  %517 = vmatprep.subr.mxu0 0.0
  %518 = vmatpush1.msra.mxu0 0.0
  %519 = vmatprep.subr.mxu0 0.0
  %520 = vmatpush1.msra.mxu0 0.0
  %521 = vmatprep.subr.mxu0 0.0
  %522 = vmatpush1.msra.mxu0 0.0
  %523 = vmatprep.subr.mxu0 0.0
  %524 = vmatpush1.msra.mxu0 0.0
  %525 = vmatprep.subr.mxu0 0.0
  %526 = vmatpush1.msra.mxu0 0.0
  %527 = vmatprep.subr.mxu0 0.0
  %528 = vmatpush1.msra.mxu0 0.0
  %529 = vmatprep.subr.mxu0 0.0
  %530 = vmatpush1.msra.mxu0 0.0
  %531 = vmatprep.subr.mxu0 0.0
  %532 = vmatpush1.msra.mxu0 0.0
  %533 = vmatprep.subr.mxu0 0.0
  %534 = vmatpush1.msra.mxu0 0.0
  %535 = vmatprep.subr.mxu0 0.0
  %536 = vmatpush1.msra.mxu0 0.0
  %537 = vmatprep.subr.mxu0 0.0
  %538 = vmatpush1.msra.mxu0 0.0
  %539 = vmatprep.subr.mxu0 0.0
  %540 = vmatpush1.msra.mxu0 0.0
  %541 = vmatprep.subr.mxu0 0.0
  %542 = vmatpush1.msra.mxu0 0.0
  %543 = vmatprep.subr.mxu0 0.0
  %544 = vmatpush1.msra.mxu0 0.0
  %545 = vmatprep.subr.mxu0 0.0
  %546 = vmatpush1.msra.mxu0 0.0
  %547 = vmatprep.subr.mxu0 0.0
  %548 = vmatpush1.msra.mxu0 0.0
  %549 = vmatprep.mubr.f32.mxu0 0.0
  %v550 = vand.u32 %v47, 4294901760
  %v551 = vsub.f32 %v47, %v550
  %v552 = vand.u32 %v551, 4294901760
  %553 = vmatmul.mubr.f32.gmra.mrb[0].mxu0 %v552
  %v554 = vpop.f32.mrb[0].mxu0
  %v555 = vadd.f32 %v429, %v554
  %v556 = vpop.f32.mrb[0].mxu0
  %557 = vmatprep.mubr.f32.mxu0 0.0
  %v558 = vand.u32 %v50, 4294901760
  %v559 = vsub.f32 %v50, %v558
  %v560 = vand.u32 %v559, 4294901760
  %561 = vmatmul.mubr.f32.gmra.mrb[0].mxu0 %v560
  %v562 = vpop.f32.mrb[0].mxu0
  %v563 = vadd.f32 %v436, %v562
  %v564 = vpop.f32.mrb[0].mxu0
  %565 = vmatprep.mubr.f32.mxu0 0.0
  %v566 = vand.u32 %v53, 4294901760
  %v567 = vsub.f32 %v53, %v566
  %v568 = vand.u32 %v567, 4294901760
  %569 = vmatmul.mubr.f32.gmra.mrb[0].mxu0 %v568
  %v570 = vpop.f32.mrb[0].mxu0
  %v571 = vadd.f32 %v443, %v570
  %v572 = vpop.f32.mrb[0].mxu0
  %573 = vmatprep.mubr.f32.mxu0 0.0
  %v574 = vand.u32 %v56, 4294901760
  %v575 = vsub.f32 %v56, %v574
  %v576 = vand.u32 %v575, 4294901760
  %577 = vmatmul.mubr.f32.gmra.mrb[0].mxu0 %v576
  %v578 = vpop.f32.mrb[0].mxu0
  %v579 = vadd.f32 %v450, %v578
  %v580 = vpop.f32.mrb[0].mxu0
  %581 = vmatprep.mubr.f32.mxu0 0.0
  %v582 = vand.u32 %v59, 4294901760
  %v583 = vsub.f32 %v59, %v582
  %v584 = vand.u32 %v583, 4294901760
  %585 = vmatmul.mubr.f32.gmra.mrb[0].mxu0 %v584
  %v586 = vpop.f32.mrb[0].mxu0
  %v587 = vadd.f32 %v457, %v586
  %v588 = vpop.f32.mrb[0].mxu0
  %589 = vmatprep.mubr.f32.mxu0 0.0
  %v590 = vand.u32 %v62, 4294901760
  %v591 = vsub.f32 %v62, %v590
  %v592 = vand.u32 %v591, 4294901760
  %593 = vmatmul.mubr.f32.gmra.mrb[0].mxu0 %v592
  %v594 = vpop.f32.mrb[0].mxu0
  %v595 = vadd.f32 %v464, %v594
  %v596 = vpop.f32.mrb[0].mxu0
  %597 = vmatprep.mubr.f32.mxu0 0.0
  %v598 = vand.u32 %v65, 4294901760
  %v599 = vsub.f32 %v65, %v598
  %v600 = vand.u32 %v599, 4294901760
  %601 = vmatmul.mubr.f32.gmra.mrb[0].mxu0 %v600
  %v602 = vpop.f32.mrb[0].mxu0
  %v603 = vadd.f32 %v471, %v602
  %v604 = vpop.f32.mrb[0].mxu0
  %605 = vmatprep.mubr.f32.mxu0 0.0
  %v606 = vand.u32 %v68, 4294901760
  %v607 = vsub.f32 %v68, %v606
  %v608 = vand.u32 %v607, 4294901760
  %609 = vmatmul.mubr.f32.gmra.mrb[0].mxu0 %v608
  %v610 = vpop.f32.mrb[0].mxu0
  %v611 = vadd.f32 %v478, %v610
  %v612 = vpop.f32.mrb[0].mxu0
  %613 = vdwg.mxu0
  %614 = vmatprep.subr.mxu0 0.0
  %v615 = vand.u32 %v34, 4294901760
  %v616 = vsub.f32 %v34, %v615
  %v617 = vand.u32 %v616, 4294901760
  %618 = vmatpush1.msra.mxu0 %v617
  %619 = vmatprep.subr.mxu0 0.0
  %v620 = vand.u32 %v35, 4294901760
  %v621 = vsub.f32 %v35, %v620
  %v622 = vand.u32 %v621, 4294901760
  %623 = vmatpush1.msra.mxu0 %v622
  %624 = vmatprep.subr.mxu0 0.0
  %v625 = vand.u32 %v36, 4294901760
  %v626 = vsub.f32 %v36, %v625
  %v627 = vand.u32 %v626, 4294901760
  %628 = vmatpush1.msra.mxu0 %v627
  %629 = vmatprep.subr.mxu0 0.0
  %v630 = vand.u32 %v37, 4294901760
  %v631 = vsub.f32 %v37, %v630
  %v632 = vand.u32 %v631, 4294901760
  %633 = vmatpush1.msra.mxu0 %v632
  %634 = vmatprep.subr.mxu0 0.0
  %635 = vmatpush1.msra.mxu0 0.0
  %636 = vmatprep.subr.mxu0 0.0
  %637 = vmatpush1.msra.mxu0 0.0
  %638 = vmatprep.subr.mxu0 0.0
  %639 = vmatpush1.msra.mxu0 0.0
  %640 = vmatprep.subr.mxu0 0.0
  %641 = vmatpush1.msra.mxu0 0.0
  %642 = vmatprep.subr.mxu0 0.0
  %643 = vmatpush1.msra.mxu0 0.0
  %644 = vmatprep.subr.mxu0 0.0
  %645 = vmatpush1.msra.mxu0 0.0
  %646 = vmatprep.subr.mxu0 0.0
  %647 = vmatpush1.msra.mxu0 0.0
  %648 = vmatprep.subr.mxu0 0.0
  %649 = vmatpush1.msra.mxu0 0.0
  %650 = vmatprep.subr.mxu0 0.0
  %651 = vmatpush1.msra.mxu0 0.0
  %652 = vmatprep.subr.mxu0 0.0
  %653 = vmatpush1.msra.mxu0 0.0
  %654 = vmatprep.subr.mxu0 0.0
  %655 = vmatpush1.msra.mxu0 0.0
  %656 = vmatprep.subr.mxu0 0.0
  %657 = vmatpush1.msra.mxu0 0.0
  %658 = vmatprep.subr.mxu0 0.0
  %659 = vmatpush1.msra.mxu0 0.0
  %660 = vmatprep.subr.mxu0 0.0
  %661 = vmatpush1.msra.mxu0 0.0
  %662 = vmatprep.subr.mxu0 0.0
  %663 = vmatpush1.msra.mxu0 0.0
  %664 = vmatprep.subr.mxu0 0.0
  %665 = vmatpush1.msra.mxu0 0.0
  %666 = vmatprep.subr.mxu0 0.0
  %667 = vmatpush1.msra.mxu0 0.0
  %668 = vmatprep.subr.mxu0 0.0
  %669 = vmatpush1.msra.mxu0 0.0
  %670 = vmatprep.subr.mxu0 0.0
  %671 = vmatpush1.msra.mxu0 0.0
  %672 = vmatprep.subr.mxu0 0.0
  %673 = vmatpush1.msra.mxu0 0.0
  %674 = vmatprep.subr.mxu0 0.0
  %675 = vmatpush1.msra.mxu0 0.0
  %676 = vmatprep.subr.mxu0 0.0
  %677 = vmatpush1.msra.mxu0 0.0
  %678 = vmatprep.subr.mxu0 0.0
  %679 = vmatpush1.msra.mxu0 0.0
  %680 = vmatprep.subr.mxu0 0.0
  %681 = vmatpush1.msra.mxu0 0.0
  %682 = vmatprep.subr.mxu0 0.0
  %683 = vmatpush1.msra.mxu0 0.0
  %684 = vmatprep.subr.mxu0 0.0
  %685 = vmatpush1.msra.mxu0 0.0
  %686 = vmatprep.subr.mxu0 0.0
  %687 = vmatpush1.msra.mxu0 0.0
  %688 = vmatprep.subr.mxu0 0.0
  %689 = vmatpush1.msra.mxu0 0.0
  %690 = vmatprep.mubr.f32.mxu0 0.0
  %v691 = vand.u32 %v47, 4294901760
  %692 = vmatmul.mubr.f32.gmra.mrb[0].mxu0 %v691
  %v693 = vpop.f32.mrb[0].mxu0
  %v694 = vadd.f32 %v555, %v693
  %v695 = vpop.f32.mrb[0].mxu0
  %696 = vmatprep.mubr.f32.mxu0 0.0
  %v697 = vand.u32 %v50, 4294901760
  %698 = vmatmul.mubr.f32.gmra.mrb[0].mxu0 %v697
  %v699 = vpop.f32.mrb[0].mxu0
  %v700 = vadd.f32 %v563, %v699
  %v701 = vpop.f32.mrb[0].mxu0
  %702 = vmatprep.mubr.f32.mxu0 0.0
  %v703 = vand.u32 %v53, 4294901760
  %704 = vmatmul.mubr.f32.gmra.mrb[0].mxu0 %v703
  %v705 = vpop.f32.mrb[0].mxu0
  %v706 = vadd.f32 %v571, %v705
  %v707 = vpop.f32.mrb[0].mxu0
  %708 = vmatprep.mubr.f32.mxu0 0.0
  %v709 = vand.u32 %v56, 4294901760
  %710 = vmatmul.mubr.f32.gmra.mrb[0].mxu0 %v709
  %v711 = vpop.f32.mrb[0].mxu0
  %v712 = vadd.f32 %v579, %v711
  %v713 = vpop.f32.mrb[0].mxu0
  %714 = vmatprep.mubr.f32.mxu0 0.0
  %v715 = vand.u32 %v59, 4294901760
  %716 = vmatmul.mubr.f32.gmra.mrb[0].mxu0 %v715
  %v717 = vpop.f32.mrb[0].mxu0
  %v718 = vadd.f32 %v587, %v717
  %v719 = vpop.f32.mrb[0].mxu0
  %720 = vmatprep.mubr.f32.mxu0 0.0
  %v721 = vand.u32 %v62, 4294901760
  %722 = vmatmul.mubr.f32.gmra.mrb[0].mxu0 %v721
  %v723 = vpop.f32.mrb[0].mxu0
  %v724 = vadd.f32 %v595, %v723
  %v725 = vpop.f32.mrb[0].mxu0
  %726 = vmatprep.mubr.f32.mxu0 0.0
  %v727 = vand.u32 %v65, 4294901760
  %728 = vmatmul.mubr.f32.gmra.mrb[0].mxu0 %v727
  %v729 = vpop.f32.mrb[0].mxu0
  %v730 = vadd.f32 %v603, %v729
  %v731 = vpop.f32.mrb[0].mxu0
  %732 = vmatprep.mubr.f32.mxu0 0.0
  %v733 = vand.u32 %v68, 4294901760
  %734 = vmatmul.mubr.f32.gmra.mrb[0].mxu0 %v733
  %v735 = vpop.f32.mrb[0].mxu0
  %v736 = vadd.f32 %v611, %v735
  %v737 = vpop.f32.mrb[0].mxu0
  %738 = vdwg.mxu0
  %739 = vmatprep.subr.mxu0 0.0
  %v740 = vand.u32 %v34, 4294901760
  %741 = vmatpush1.msra.mxu0 %v740
  %742 = vmatprep.subr.mxu0 0.0
  %v743 = vand.u32 %v35, 4294901760
  %744 = vmatpush1.msra.mxu0 %v743
  %745 = vmatprep.subr.mxu0 0.0
  %v746 = vand.u32 %v36, 4294901760
  %747 = vmatpush1.msra.mxu0 %v746
  %748 = vmatprep.subr.mxu0 0.0
  %v749 = vand.u32 %v37, 4294901760
  %750 = vmatpush1.msra.mxu0 %v749
  %751 = vmatprep.subr.mxu0 0.0
  %752 = vmatpush1.msra.mxu0 0.0
  %753 = vmatprep.subr.mxu0 0.0
  %754 = vmatpush1.msra.mxu0 0.0
  %755 = vmatprep.subr.mxu0 0.0
  %756 = vmatpush1.msra.mxu0 0.0
  %757 = vmatprep.subr.mxu0 0.0
  %758 = vmatpush1.msra.mxu0 0.0
  %759 = vmatprep.subr.mxu0 0.0
  %760 = vmatpush1.msra.mxu0 0.0
  %761 = vmatprep.subr.mxu0 0.0
  %762 = vmatpush1.msra.mxu0 0.0
  %763 = vmatprep.subr.mxu0 0.0
  %764 = vmatpush1.msra.mxu0 0.0
  %765 = vmatprep.subr.mxu0 0.0
  %766 = vmatpush1.msra.mxu0 0.0
  %767 = vmatprep.subr.mxu0 0.0
  %768 = vmatpush1.msra.mxu0 0.0
  %769 = vmatprep.subr.mxu0 0.0
  %770 = vmatpush1.msra.mxu0 0.0
  %771 = vmatprep.subr.mxu0 0.0
  %772 = vmatpush1.msra.mxu0 0.0
  %773 = vmatprep.subr.mxu0 0.0
  %774 = vmatpush1.msra.mxu0 0.0
  %775 = vmatprep.subr.mxu0 0.0
  %776 = vmatpush1.msra.mxu0 0.0
  %777 = vmatprep.subr.mxu0 0.0
  %778 = vmatpush1.msra.mxu0 0.0
  %779 = vmatprep.subr.mxu0 0.0
  %780 = vmatpush1.msra.mxu0 0.0
  %781 = vmatprep.subr.mxu0 0.0
  %782 = vmatpush1.msra.mxu0 0.0
  %783 = vmatprep.subr.mxu0 0.0
  %784 = vmatpush1.msra.mxu0 0.0
  %785 = vmatprep.subr.mxu0 0.0
  %786 = vmatpush1.msra.mxu0 0.0
  %787 = vmatprep.subr.mxu0 0.0
  %788 = vmatpush1.msra.mxu0 0.0
  %789 = vmatprep.subr.mxu0 0.0
  %790 = vmatpush1.msra.mxu0 0.0
  %791 = vmatprep.subr.mxu0 0.0
  %792 = vmatpush1.msra.mxu0 0.0
  %793 = vmatprep.subr.mxu0 0.0
  %794 = vmatpush1.msra.mxu0 0.0
  %795 = vmatprep.subr.mxu0 0.0
  %796 = vmatpush1.msra.mxu0 0.0
  %797 = vmatprep.subr.mxu0 0.0
  %798 = vmatpush1.msra.mxu0 0.0
  %799 = vmatprep.subr.mxu0 0.0
  %800 = vmatpush1.msra.mxu0 0.0
  %801 = vmatprep.subr.mxu0 0.0
  %802 = vmatpush1.msra.mxu0 0.0
  %803 = vmatprep.subr.mxu0 0.0
  %804 = vmatpush1.msra.mxu0 0.0
  %805 = vmatprep.subr.mxu0 0.0
  %806 = vmatpush1.msra.mxu0 0.0
  %807 = vmatprep.mubr.f32.mxu0 0.0
  %v808 = vand.u32 %v47, 4294901760
  %809 = vmatmul.mubr.f32.gmra.mrb[0].mxu0 %v808
  %v810 = vpop.f32.mrb[0].mxu0
  %v811 = vadd.f32 %v694, %v810
  %v812 = vpop.f32.mrb[0].mxu0
  %813 = vmatprep.mubr.f32.mxu0 0.0
  %v814 = vand.u32 %v50, 4294901760
  %815 = vmatmul.mubr.f32.gmra.mrb[0].mxu0 %v814
  %v816 = vpop.f32.mrb[0].mxu0
  %v817 = vadd.f32 %v700, %v816
  %v818 = vpop.f32.mrb[0].mxu0
  %819 = vmatprep.mubr.f32.mxu0 0.0
  %v820 = vand.u32 %v53, 4294901760
  %821 = vmatmul.mubr.f32.gmra.mrb[0].mxu0 %v820
  %v822 = vpop.f32.mrb[0].mxu0
  %v823 = vadd.f32 %v706, %v822
  %v824 = vpop.f32.mrb[0].mxu0
  %825 = vmatprep.mubr.f32.mxu0 0.0
  %v826 = vand.u32 %v56, 4294901760
  %827 = vmatmul.mubr.f32.gmra.mrb[0].mxu0 %v826
  %v828 = vpop.f32.mrb[0].mxu0
  %v829 = vadd.f32 %v712, %v828
  %v830 = vpop.f32.mrb[0].mxu0
  %831 = vmatprep.mubr.f32.mxu0 0.0
  %v832 = vand.u32 %v59, 4294901760
  %833 = vmatmul.mubr.f32.gmra.mrb[0].mxu0 %v832
  %v834 = vpop.f32.mrb[0].mxu0
  %v835 = vadd.f32 %v718, %v834
  %v836 = vpop.f32.mrb[0].mxu0
  %837 = vmatprep.mubr.f32.mxu0 0.0
  %v838 = vand.u32 %v62, 4294901760
  %839 = vmatmul.mubr.f32.gmra.mrb[0].mxu0 %v838
  %v840 = vpop.f32.mrb[0].mxu0
  %v841 = vadd.f32 %v724, %v840
  %v842 = vpop.f32.mrb[0].mxu0
  %843 = vmatprep.mubr.f32.mxu0 0.0
  %v844 = vand.u32 %v65, 4294901760
  %845 = vmatmul.mubr.f32.gmra.mrb[0].mxu0 %v844
  %v846 = vpop.f32.mrb[0].mxu0
  %v847 = vadd.f32 %v730, %v846
  %v848 = vpop.f32.mrb[0].mxu0
  %849 = vmatprep.mubr.f32.mxu0 0.0
  %v850 = vand.u32 %v68, 4294901760
  %851 = vmatmul.mubr.f32.gmra.mrb[0].mxu0 %v850
  %v852 = vpop.f32.mrb[0].mxu0
  %v853 = vadd.f32 %v736, %v852
  %v854 = vpop.f32.mrb[0].mxu0
  %855 = vdwg.mxu0
  %v856 = vld [vmem:[%s3] sm:$0x1]
  %v858 = vlaneseq
  %v859 = vshrl.u32 %v858, 7
  %v860 = vsub.s32 0, %v859
  %v861 = vrot.slane %v856, %v860
  %v863 = vmul.f32 %v811, %v861
  %v864 = vmul.f32 %v817, %v861
  %v865 = vmul.f32 %v823, %v861
  %v866 = vmul.f32 %v829, %v861
  %v867 = vmul.f32 %v835, %v861
  %v868 = vmul.f32 %v841, %v861
  %v869 = vmul.f32 %v847, %v861
  %v870 = vmul.f32 %v853, %v861
  %v871 = vld [vmem:[%s4] sm:$0x1]
  %v873 = vlaneseq
  %v874 = vshrl.u32 %v873, 7
  %v875 = vsub.s32 0, %v874
  %v876 = vrot.slane %v871, %v875
  %v878 = vadd.f32 %v863, %v876
  %v879 = vadd.f32 %v864, %v876
  %v880 = vadd.f32 %v865, %v876
  %v881 = vadd.f32 %v866, %v876
  %v882 = vadd.f32 %v867, %v876
  %v883 = vadd.f32 %v868, %v876
  %v884 = vadd.f32 %v869, %v876
  %v885 = vadd.f32 %v870, %v876
  %v886 = vmax.f32 %v878, 0.0
  %v887 = vmax.f32 %v879, 0.0
  %v888 = vmax.f32 %v880, 0.0
  %v889 = vmax.f32 %v881, 0.0
  %v890 = vmax.f32 %v882, 0.0
  %v891 = vmax.f32 %v883, 0.0
  %v892 = vmax.f32 %v884, 0.0
  %v893 = vmax.f32 %v885, 0.0
  %v894 = vld [vmem:[%s5] sm:$0xff]
  %v895 = vld [vmem:[%s5 + $0x8] sm:$0xff]
  %v896 = vld [vmem:[%s5 + $0x10] sm:$0xff]
  %v897 = vld [vmem:[%s5 + $0x18] sm:$0xff]
  %v898 = vld [vmem:[%s6] sm:$0x1]
  %v900 = vlaneseq
  %v901 = vshrl.u32 %v900, 7
  %v902 = vsub.s32 0, %v901
  %v903 = vrot.slane %v898, %v902
  %v906 = vsel %vm45, %v886, 0
  %v909 = vsel %vm45, %v887, 0
  %v912 = vsel %vm45, %v888, 0
  %v915 = vsel %vm45, %v889, 0
  %v918 = vsel %vm45, %v890, 0
  %v921 = vsel %vm45, %v891, 0
  %v924 = vsel %vm45, %v892, 0
  %v927 = vsel %vm45, %v893, 0
  %929 = vmatprep.subr.mxu0 0.0
  %v930 = vand.u32 %v894, 4294901760
  %931 = vmatpush1.msra.mxu0 %v930
  %932 = vmatprep.subr.mxu0 0.0
  %v933 = vand.u32 %v895, 4294901760
  %934 = vmatpush1.msra.mxu0 %v933
  %935 = vmatprep.subr.mxu0 0.0
  %v936 = vand.u32 %v896, 4294901760
  %937 = vmatpush1.msra.mxu0 %v936
  %938 = vmatprep.subr.mxu0 0.0
  %v939 = vand.u32 %v897, 4294901760
  %940 = vmatpush1.msra.mxu0 %v939
  %941 = vmatprep.subr.mxu0 0.0
  %942 = vmatpush1.msra.mxu0 0.0
  %943 = vmatprep.subr.mxu0 0.0
  %944 = vmatpush1.msra.mxu0 0.0
  %945 = vmatprep.subr.mxu0 0.0
  %946 = vmatpush1.msra.mxu0 0.0
  %947 = vmatprep.subr.mxu0 0.0
  %948 = vmatpush1.msra.mxu0 0.0
  %949 = vmatprep.subr.mxu0 0.0
  %950 = vmatpush1.msra.mxu0 0.0
  %951 = vmatprep.subr.mxu0 0.0
  %952 = vmatpush1.msra.mxu0 0.0
  %953 = vmatprep.subr.mxu0 0.0
  %954 = vmatpush1.msra.mxu0 0.0
  %955 = vmatprep.subr.mxu0 0.0
  %956 = vmatpush1.msra.mxu0 0.0
  %957 = vmatprep.subr.mxu0 0.0
  %958 = vmatpush1.msra.mxu0 0.0
  %959 = vmatprep.subr.mxu0 0.0
  %960 = vmatpush1.msra.mxu0 0.0
  %961 = vmatprep.subr.mxu0 0.0
  %962 = vmatpush1.msra.mxu0 0.0
  %963 = vmatprep.subr.mxu0 0.0
  %964 = vmatpush1.msra.mxu0 0.0
  %965 = vmatprep.subr.mxu0 0.0
  %966 = vmatpush1.msra.mxu0 0.0
  %967 = vmatprep.subr.mxu0 0.0
  %968 = vmatpush1.msra.mxu0 0.0
  %969 = vmatprep.subr.mxu0 0.0
  %970 = vmatpush1.msra.mxu0 0.0
  %971 = vmatprep.subr.mxu0 0.0
  %972 = vmatpush1.msra.mxu0 0.0
  %973 = vmatprep.subr.mxu0 0.0
  %974 = vmatpush1.msra.mxu0 0.0
  %975 = vmatprep.subr.mxu0 0.0
  %976 = vmatpush1.msra.mxu0 0.0
  %977 = vmatprep.subr.mxu0 0.0
  %978 = vmatpush1.msra.mxu0 0.0
  %979 = vmatprep.subr.mxu0 0.0
  %980 = vmatpush1.msra.mxu0 0.0
  %981 = vmatprep.subr.mxu0 0.0
  %982 = vmatpush1.msra.mxu0 0.0
  %983 = vmatprep.subr.mxu0 0.0
  %984 = vmatpush1.msra.mxu0 0.0
  %985 = vmatprep.subr.mxu0 0.0
  %986 = vmatpush1.msra.mxu0 0.0
  %987 = vmatprep.subr.mxu0 0.0
  %988 = vmatpush1.msra.mxu0 0.0
  %989 = vmatprep.subr.mxu0 0.0
  %990 = vmatpush1.msra.mxu0 0.0
  %991 = vmatprep.subr.mxu0 0.0
  %992 = vmatpush1.msra.mxu0 0.0
  %993 = vmatprep.subr.mxu0 0.0
  %994 = vmatpush1.msra.mxu0 0.0
  %995 = vmatprep.subr.mxu0 0.0
  %996 = vmatpush1.msra.mxu0 0.0
  %997 = vmatprep.mubr.f32.mxu0 0.0
  %v998 = vand.u32 %v906, 4294901760
  %v999 = vsub.f32 %v906, %v998
  %v1000 = vand.u32 %v999, 4294901760
  %v1001 = vsub.f32 %v999, %v1000
  %v1002 = vand.u32 %v1001, 4294901760
  %1003 = vmatmul.mubr.f32.gmra.mrb[0].mxu0 %v1002
  %v1004 = vpop.f32.mrb[0].mxu0
  %v1005 = vadd.f32 %v903, %v1004
  %v1006 = vpop.f32.mrb[0].mxu0
  %1007 = vmatprep.mubr.f32.mxu0 0.0
  %v1008 = vand.u32 %v909, 4294901760
  %v1009 = vsub.f32 %v909, %v1008
  %v1010 = vand.u32 %v1009, 4294901760
  %v1011 = vsub.f32 %v1009, %v1010
  %v1012 = vand.u32 %v1011, 4294901760
  %1013 = vmatmul.mubr.f32.gmra.mrb[0].mxu0 %v1012
  %v1014 = vpop.f32.mrb[0].mxu0
  %v1015 = vadd.f32 %v903, %v1014
  %v1016 = vpop.f32.mrb[0].mxu0
  %1017 = vmatprep.mubr.f32.mxu0 0.0
  %v1018 = vand.u32 %v912, 4294901760
  %v1019 = vsub.f32 %v912, %v1018
  %v1020 = vand.u32 %v1019, 4294901760
  %v1021 = vsub.f32 %v1019, %v1020
  %v1022 = vand.u32 %v1021, 4294901760
  %1023 = vmatmul.mubr.f32.gmra.mrb[0].mxu0 %v1022
  %v1024 = vpop.f32.mrb[0].mxu0
  %v1025 = vadd.f32 %v903, %v1024
  %v1026 = vpop.f32.mrb[0].mxu0
  %1027 = vmatprep.mubr.f32.mxu0 0.0
  %v1028 = vand.u32 %v915, 4294901760
  %v1029 = vsub.f32 %v915, %v1028
  %v1030 = vand.u32 %v1029, 4294901760
  %v1031 = vsub.f32 %v1029, %v1030
  %v1032 = vand.u32 %v1031, 4294901760
  %1033 = vmatmul.mubr.f32.gmra.mrb[0].mxu0 %v1032
  %v1034 = vpop.f32.mrb[0].mxu0
  %v1035 = vadd.f32 %v903, %v1034
  %v1036 = vpop.f32.mrb[0].mxu0
  %1037 = vmatprep.mubr.f32.mxu0 0.0
  %v1038 = vand.u32 %v918, 4294901760
  %v1039 = vsub.f32 %v918, %v1038
  %v1040 = vand.u32 %v1039, 4294901760
  %v1041 = vsub.f32 %v1039, %v1040
  %v1042 = vand.u32 %v1041, 4294901760
  %1043 = vmatmul.mubr.f32.gmra.mrb[0].mxu0 %v1042
  %v1044 = vpop.f32.mrb[0].mxu0
  %v1045 = vadd.f32 %v903, %v1044
  %v1046 = vpop.f32.mrb[0].mxu0
  %1047 = vmatprep.mubr.f32.mxu0 0.0
  %v1048 = vand.u32 %v921, 4294901760
  %v1049 = vsub.f32 %v921, %v1048
  %v1050 = vand.u32 %v1049, 4294901760
  %v1051 = vsub.f32 %v1049, %v1050
  %v1052 = vand.u32 %v1051, 4294901760
  %1053 = vmatmul.mubr.f32.gmra.mrb[0].mxu0 %v1052
  %v1054 = vpop.f32.mrb[0].mxu0
  %v1055 = vadd.f32 %v903, %v1054
  %v1056 = vpop.f32.mrb[0].mxu0
  %1057 = vmatprep.mubr.f32.mxu0 0.0
  %v1058 = vand.u32 %v924, 4294901760
  %v1059 = vsub.f32 %v924, %v1058
  %v1060 = vand.u32 %v1059, 4294901760
  %v1061 = vsub.f32 %v1059, %v1060
  %v1062 = vand.u32 %v1061, 4294901760
  %1063 = vmatmul.mubr.f32.gmra.mrb[0].mxu0 %v1062
  %v1064 = vpop.f32.mrb[0].mxu0
  %v1065 = vadd.f32 %v903, %v1064
  %v1066 = vpop.f32.mrb[0].mxu0
  %1067 = vmatprep.mubr.f32.mxu0 0.0
  %v1068 = vand.u32 %v927, 4294901760
  %v1069 = vsub.f32 %v927, %v1068
  %v1070 = vand.u32 %v1069, 4294901760
  %v1071 = vsub.f32 %v1069, %v1070
  %v1072 = vand.u32 %v1071, 4294901760
  %1073 = vmatmul.mubr.f32.gmra.mrb[0].mxu0 %v1072
  %v1074 = vpop.f32.mrb[0].mxu0
  %v1075 = vadd.f32 %v903, %v1074
  %v1076 = vpop.f32.mrb[0].mxu0
  %1077 = vdwg.mxu0
  %1078 = vmatprep.subr.mxu0 0.0
  %v1079 = vand.u32 %v894, 4294901760
  %v1080 = vsub.f32 %v894, %v1079
  %v1081 = vand.u32 %v1080, 4294901760
  %v1082 = vsub.f32 %v1080, %v1081
  %v1083 = vand.u32 %v1082, 4294901760
  %1084 = vmatpush1.msra.mxu0 %v1083
  %1085 = vmatprep.subr.mxu0 0.0
  %v1086 = vand.u32 %v895, 4294901760
  %v1087 = vsub.f32 %v895, %v1086
  %v1088 = vand.u32 %v1087, 4294901760
  %v1089 = vsub.f32 %v1087, %v1088
  %v1090 = vand.u32 %v1089, 4294901760
  %1091 = vmatpush1.msra.mxu0 %v1090
  %1092 = vmatprep.subr.mxu0 0.0
  %v1093 = vand.u32 %v896, 4294901760
  %v1094 = vsub.f32 %v896, %v1093
  %v1095 = vand.u32 %v1094, 4294901760
  %v1096 = vsub.f32 %v1094, %v1095
  %v1097 = vand.u32 %v1096, 4294901760
  %1098 = vmatpush1.msra.mxu0 %v1097
  %1099 = vmatprep.subr.mxu0 0.0
  %v1100 = vand.u32 %v897, 4294901760
  %v1101 = vsub.f32 %v897, %v1100
  %v1102 = vand.u32 %v1101, 4294901760
  %v1103 = vsub.f32 %v1101, %v1102
  %v1104 = vand.u32 %v1103, 4294901760
  %1105 = vmatpush1.msra.mxu0 %v1104
  %1106 = vmatprep.subr.mxu0 0.0
  %1107 = vmatpush1.msra.mxu0 0.0
  %1108 = vmatprep.subr.mxu0 0.0
  %1109 = vmatpush1.msra.mxu0 0.0
  %1110 = vmatprep.subr.mxu0 0.0
  %1111 = vmatpush1.msra.mxu0 0.0
  %1112 = vmatprep.subr.mxu0 0.0
  %1113 = vmatpush1.msra.mxu0 0.0
  %1114 = vmatprep.subr.mxu0 0.0
  %1115 = vmatpush1.msra.mxu0 0.0
  %1116 = vmatprep.subr.mxu0 0.0
  %1117 = vmatpush1.msra.mxu0 0.0
  %1118 = vmatprep.subr.mxu0 0.0
  %1119 = vmatpush1.msra.mxu0 0.0
  %1120 = vmatprep.subr.mxu0 0.0
  %1121 = vmatpush1.msra.mxu0 0.0
  %1122 = vmatprep.subr.mxu0 0.0
  %1123 = vmatpush1.msra.mxu0 0.0
  %1124 = vmatprep.subr.mxu0 0.0
  %1125 = vmatpush1.msra.mxu0 0.0
  %1126 = vmatprep.subr.mxu0 0.0
  %1127 = vmatpush1.msra.mxu0 0.0
  %1128 = vmatprep.subr.mxu0 0.0
  %1129 = vmatpush1.msra.mxu0 0.0
  %1130 = vmatprep.subr.mxu0 0.0
  %1131 = vmatpush1.msra.mxu0 0.0
  %1132 = vmatprep.subr.mxu0 0.0
  %1133 = vmatpush1.msra.mxu0 0.0
  %1134 = vmatprep.subr.mxu0 0.0
  %1135 = vmatpush1.msra.mxu0 0.0
  %1136 = vmatprep.subr.mxu0 0.0
  %1137 = vmatpush1.msra.mxu0 0.0
  %1138 = vmatprep.subr.mxu0 0.0
  %1139 = vmatpush1.msra.mxu0 0.0
  %1140 = vmatprep.subr.mxu0 0.0
  %1141 = vmatpush1.msra.mxu0 0.0
  %1142 = vmatprep.subr.mxu0 0.0
  %1143 = vmatpush1.msra.mxu0 0.0
  %1144 = vmatprep.subr.mxu0 0.0
  %1145 = vmatpush1.msra.mxu0 0.0
  %1146 = vmatprep.subr.mxu0 0.0
  %1147 = vmatpush1.msra.mxu0 0.0
  %1148 = vmatprep.subr.mxu0 0.0
  %1149 = vmatpush1.msra.mxu0 0.0
  %1150 = vmatprep.subr.mxu0 0.0
  %1151 = vmatpush1.msra.mxu0 0.0
  %1152 = vmatprep.subr.mxu0 0.0
  %1153 = vmatpush1.msra.mxu0 0.0
  %1154 = vmatprep.subr.mxu0 0.0
  %1155 = vmatpush1.msra.mxu0 0.0
  %1156 = vmatprep.subr.mxu0 0.0
  %1157 = vmatpush1.msra.mxu0 0.0
  %1158 = vmatprep.subr.mxu0 0.0
  %1159 = vmatpush1.msra.mxu0 0.0
  %1160 = vmatprep.subr.mxu0 0.0
  %1161 = vmatpush1.msra.mxu0 0.0
  %1162 = vmatprep.mubr.f32.mxu0 0.0
  %v1163 = vand.u32 %v906, 4294901760
  %1164 = vmatmul.mubr.f32.gmra.mrb[0].mxu0 %v1163
  %v1165 = vpop.f32.mrb[0].mxu0
  %v1166 = vadd.f32 %v1005, %v1165
  %v1167 = vpop.f32.mrb[0].mxu0
  %1168 = vmatprep.mubr.f32.mxu0 0.0
  %v1169 = vand.u32 %v909, 4294901760
  %1170 = vmatmul.mubr.f32.gmra.mrb[0].mxu0 %v1169
  %v1171 = vpop.f32.mrb[0].mxu0
  %v1172 = vadd.f32 %v1015, %v1171
  %v1173 = vpop.f32.mrb[0].mxu0
  %1174 = vmatprep.mubr.f32.mxu0 0.0
  %v1175 = vand.u32 %v912, 4294901760
  %1176 = vmatmul.mubr.f32.gmra.mrb[0].mxu0 %v1175
  %v1177 = vpop.f32.mrb[0].mxu0
  %v1178 = vadd.f32 %v1025, %v1177
  %v1179 = vpop.f32.mrb[0].mxu0
  %1180 = vmatprep.mubr.f32.mxu0 0.0
  %v1181 = vand.u32 %v915, 4294901760
  %1182 = vmatmul.mubr.f32.gmra.mrb[0].mxu0 %v1181
  %v1183 = vpop.f32.mrb[0].mxu0
  %v1184 = vadd.f32 %v1035, %v1183
  %v1185 = vpop.f32.mrb[0].mxu0
  %1186 = vmatprep.mubr.f32.mxu0 0.0
  %v1187 = vand.u32 %v918, 4294901760
  %1188 = vmatmul.mubr.f32.gmra.mrb[0].mxu0 %v1187
  %v1189 = vpop.f32.mrb[0].mxu0
  %v1190 = vadd.f32 %v1045, %v1189
  %v1191 = vpop.f32.mrb[0].mxu0
  %1192 = vmatprep.mubr.f32.mxu0 0.0
  %v1193 = vand.u32 %v921, 4294901760
  %1194 = vmatmul.mubr.f32.gmra.mrb[0].mxu0 %v1193
  %v1195 = vpop.f32.mrb[0].mxu0
  %v1196 = vadd.f32 %v1055, %v1195
  %v1197 = vpop.f32.mrb[0].mxu0
  %1198 = vmatprep.mubr.f32.mxu0 0.0
  %v1199 = vand.u32 %v924, 4294901760
  %1200 = vmatmul.mubr.f32.gmra.mrb[0].mxu0 %v1199
  %v1201 = vpop.f32.mrb[0].mxu0
  %v1202 = vadd.f32 %v1065, %v1201
  %v1203 = vpop.f32.mrb[0].mxu0
  %1204 = vmatprep.mubr.f32.mxu0 0.0
  %v1205 = vand.u32 %v927, 4294901760
  %1206 = vmatmul.mubr.f32.gmra.mrb[0].mxu0 %v1205
  %v1207 = vpop.f32.mrb[0].mxu0
  %v1208 = vadd.f32 %v1075, %v1207
  %v1209 = vpop.f32.mrb[0].mxu0
  %1210 = vdwg.mxu0
  %1211 = vmatprep.subr.mxu0 0.0
  %v1212 = vand.u32 %v894, 4294901760
  %v1213 = vsub.f32 %v894, %v1212
  %1214 = vmatpush1.msra.mxu0 %v1213
  %1215 = vmatprep.subr.mxu0 0.0
  %v1216 = vand.u32 %v895, 4294901760
  %v1217 = vsub.f32 %v895, %v1216
  %1218 = vmatpush1.msra.mxu0 %v1217
  %1219 = vmatprep.subr.mxu0 0.0
  %v1220 = vand.u32 %v896, 4294901760
  %v1221 = vsub.f32 %v896, %v1220
  %1222 = vmatpush1.msra.mxu0 %v1221
  %1223 = vmatprep.subr.mxu0 0.0
  %v1224 = vand.u32 %v897, 4294901760
  %v1225 = vsub.f32 %v897, %v1224
  %1226 = vmatpush1.msra.mxu0 %v1225
  %1227 = vmatprep.subr.mxu0 0.0
  %1228 = vmatpush1.msra.mxu0 0.0
  %1229 = vmatprep.subr.mxu0 0.0
  %1230 = vmatpush1.msra.mxu0 0.0
  %1231 = vmatprep.subr.mxu0 0.0
  %1232 = vmatpush1.msra.mxu0 0.0
  %1233 = vmatprep.subr.mxu0 0.0
  %1234 = vmatpush1.msra.mxu0 0.0
  %1235 = vmatprep.subr.mxu0 0.0
  %1236 = vmatpush1.msra.mxu0 0.0
  %1237 = vmatprep.subr.mxu0 0.0
  %1238 = vmatpush1.msra.mxu0 0.0
  %1239 = vmatprep.subr.mxu0 0.0
  %1240 = vmatpush1.msra.mxu0 0.0
  %1241 = vmatprep.subr.mxu0 0.0
  %1242 = vmatpush1.msra.mxu0 0.0
  %1243 = vmatprep.subr.mxu0 0.0
  %1244 = vmatpush1.msra.mxu0 0.0
  %1245 = vmatprep.subr.mxu0 0.0
  %1246 = vmatpush1.msra.mxu0 0.0
  %1247 = vmatprep.subr.mxu0 0.0
  %1248 = vmatpush1.msra.mxu0 0.0
  %1249 = vmatprep.subr.mxu0 0.0
  %1250 = vmatpush1.msra.mxu0 0.0
  %1251 = vmatprep.subr.mxu0 0.0
  %1252 = vmatpush1.msra.mxu0 0.0
  %1253 = vmatprep.subr.mxu0 0.0
  %1254 = vmatpush1.msra.mxu0 0.0
  %1255 = vmatprep.subr.mxu0 0.0
  %1256 = vmatpush1.msra.mxu0 0.0
  %1257 = vmatprep.subr.mxu0 0.0
  %1258 = vmatpush1.msra.mxu0 0.0
  %1259 = vmatprep.subr.mxu0 0.0
  %1260 = vmatpush1.msra.mxu0 0.0
  %1261 = vmatprep.subr.mxu0 0.0
  %1262 = vmatpush1.msra.mxu0 0.0
  %1263 = vmatprep.subr.mxu0 0.0
  %1264 = vmatpush1.msra.mxu0 0.0
  %1265 = vmatprep.subr.mxu0 0.0
  %1266 = vmatpush1.msra.mxu0 0.0
  %1267 = vmatprep.subr.mxu0 0.0
  %1268 = vmatpush1.msra.mxu0 0.0
  %1269 = vmatprep.subr.mxu0 0.0
  %1270 = vmatpush1.msra.mxu0 0.0
  %1271 = vmatprep.subr.mxu0 0.0
  %1272 = vmatpush1.msra.mxu0 0.0
  %1273 = vmatprep.subr.mxu0 0.0
  %1274 = vmatpush1.msra.mxu0 0.0
  %1275 = vmatprep.subr.mxu0 0.0
  %1276 = vmatpush1.msra.mxu0 0.0
  %1277 = vmatprep.subr.mxu0 0.0
  %1278 = vmatpush1.msra.mxu0 0.0
  %1279 = vmatprep.subr.mxu0 0.0
  %1280 = vmatpush1.msra.mxu0 0.0
  %1281 = vmatprep.subr.mxu0 0.0
  %1282 = vmatpush1.msra.mxu0 0.0
  %1283 = vmatprep.mubr.f32.mxu0 0.0
  %v1284 = vand.u32 %v906, 4294901760
  %v1285 = vsub.f32 %v906, %v1284
  %1286 = vmatmul.mubr.f32.gmra.mrb[0].mxu0 %v1285
  %v1287 = vpop.f32.mrb[0].mxu0
  %v1288 = vadd.f32 %v1166, %v1287
  %v1289 = vpop.f32.mrb[0].mxu0
  %1290 = vmatprep.mubr.f32.mxu0 0.0
  %v1291 = vand.u32 %v909, 4294901760
  %v1292 = vsub.f32 %v909, %v1291
  %1293 = vmatmul.mubr.f32.gmra.mrb[0].mxu0 %v1292
  %v1294 = vpop.f32.mrb[0].mxu0
  %v1295 = vadd.f32 %v1172, %v1294
  %v1296 = vpop.f32.mrb[0].mxu0
  %1297 = vmatprep.mubr.f32.mxu0 0.0
  %v1298 = vand.u32 %v912, 4294901760
  %v1299 = vsub.f32 %v912, %v1298
  %1300 = vmatmul.mubr.f32.gmra.mrb[0].mxu0 %v1299
  %v1301 = vpop.f32.mrb[0].mxu0
  %v1302 = vadd.f32 %v1178, %v1301
  %v1303 = vpop.f32.mrb[0].mxu0
  %1304 = vmatprep.mubr.f32.mxu0 0.0
  %v1305 = vand.u32 %v915, 4294901760
  %v1306 = vsub.f32 %v915, %v1305
  %1307 = vmatmul.mubr.f32.gmra.mrb[0].mxu0 %v1306
  %v1308 = vpop.f32.mrb[0].mxu0
  %v1309 = vadd.f32 %v1184, %v1308
  %v1310 = vpop.f32.mrb[0].mxu0
  %1311 = vmatprep.mubr.f32.mxu0 0.0
  %v1312 = vand.u32 %v918, 4294901760
  %v1313 = vsub.f32 %v918, %v1312
  %1314 = vmatmul.mubr.f32.gmra.mrb[0].mxu0 %v1313
  %v1315 = vpop.f32.mrb[0].mxu0
  %v1316 = vadd.f32 %v1190, %v1315
  %v1317 = vpop.f32.mrb[0].mxu0
  %1318 = vmatprep.mubr.f32.mxu0 0.0
  %v1319 = vand.u32 %v921, 4294901760
  %v1320 = vsub.f32 %v921, %v1319
  %1321 = vmatmul.mubr.f32.gmra.mrb[0].mxu0 %v1320
  %v1322 = vpop.f32.mrb[0].mxu0
  %v1323 = vadd.f32 %v1196, %v1322
  %v1324 = vpop.f32.mrb[0].mxu0
  %1325 = vmatprep.mubr.f32.mxu0 0.0
  %v1326 = vand.u32 %v924, 4294901760
  %v1327 = vsub.f32 %v924, %v1326
  %1328 = vmatmul.mubr.f32.gmra.mrb[0].mxu0 %v1327
  %v1329 = vpop.f32.mrb[0].mxu0
  %v1330 = vadd.f32 %v1202, %v1329
  %v1331 = vpop.f32.mrb[0].mxu0
  %1332 = vmatprep.mubr.f32.mxu0 0.0
  %v1333 = vand.u32 %v927, 4294901760
  %v1334 = vsub.f32 %v927, %v1333
  %1335 = vmatmul.mubr.f32.gmra.mrb[0].mxu0 %v1334
  %v1336 = vpop.f32.mrb[0].mxu0
  %v1337 = vadd.f32 %v1208, %v1336
  %v1338 = vpop.f32.mrb[0].mxu0
  %1339 = vdwg.mxu0
  %1340 = vmatprep.subr.mxu0 0.0
  %v1341 = vand.u32 %v894, 4294901760
  %1342 = vmatpush1.msra.mxu0 %v1341
  %1343 = vmatprep.subr.mxu0 0.0
  %v1344 = vand.u32 %v895, 4294901760
  %1345 = vmatpush1.msra.mxu0 %v1344
  %1346 = vmatprep.subr.mxu0 0.0
  %v1347 = vand.u32 %v896, 4294901760
  %1348 = vmatpush1.msra.mxu0 %v1347
  %1349 = vmatprep.subr.mxu0 0.0
  %v1350 = vand.u32 %v897, 4294901760
  %1351 = vmatpush1.msra.mxu0 %v1350
  %1352 = vmatprep.subr.mxu0 0.0
  %1353 = vmatpush1.msra.mxu0 0.0
  %1354 = vmatprep.subr.mxu0 0.0
  %1355 = vmatpush1.msra.mxu0 0.0
  %1356 = vmatprep.subr.mxu0 0.0
  %1357 = vmatpush1.msra.mxu0 0.0
  %1358 = vmatprep.subr.mxu0 0.0
  %1359 = vmatpush1.msra.mxu0 0.0
  %1360 = vmatprep.subr.mxu0 0.0
  %1361 = vmatpush1.msra.mxu0 0.0
  %1362 = vmatprep.subr.mxu0 0.0
  %1363 = vmatpush1.msra.mxu0 0.0
  %1364 = vmatprep.subr.mxu0 0.0
  %1365 = vmatpush1.msra.mxu0 0.0
  %1366 = vmatprep.subr.mxu0 0.0
  %1367 = vmatpush1.msra.mxu0 0.0
  %1368 = vmatprep.subr.mxu0 0.0
  %1369 = vmatpush1.msra.mxu0 0.0
  %1370 = vmatprep.subr.mxu0 0.0
  %1371 = vmatpush1.msra.mxu0 0.0
  %1372 = vmatprep.subr.mxu0 0.0
  %1373 = vmatpush1.msra.mxu0 0.0
  %1374 = vmatprep.subr.mxu0 0.0
  %1375 = vmatpush1.msra.mxu0 0.0
  %1376 = vmatprep.subr.mxu0 0.0
  %1377 = vmatpush1.msra.mxu0 0.0
  %1378 = vmatprep.subr.mxu0 0.0
  %1379 = vmatpush1.msra.mxu0 0.0
  %1380 = vmatprep.subr.mxu0 0.0
  %1381 = vmatpush1.msra.mxu0 0.0
  %1382 = vmatprep.subr.mxu0 0.0
  %1383 = vmatpush1.msra.mxu0 0.0
  %1384 = vmatprep.subr.mxu0 0.0
  %1385 = vmatpush1.msra.mxu0 0.0
  %1386 = vmatprep.subr.mxu0 0.0
  %1387 = vmatpush1.msra.mxu0 0.0
  %1388 = vmatprep.subr.mxu0 0.0
  %1389 = vmatpush1.msra.mxu0 0.0
  %1390 = vmatprep.subr.mxu0 0.0
  %1391 = vmatpush1.msra.mxu0 0.0
  %1392 = vmatprep.subr.mxu0 0.0
  %1393 = vmatpush1.msra.mxu0 0.0
  %1394 = vmatprep.subr.mxu0 0.0
  %1395 = vmatpush1.msra.mxu0 0.0
  %1396 = vmatprep.subr.mxu0 0.0
  %1397 = vmatpush1.msra.mxu0 0.0
  %1398 = vmatprep.subr.mxu0 0.0
  %1399 = vmatpush1.msra.mxu0 0.0
  %1400 = vmatprep.subr.mxu0 0.0
  %1401 = vmatpush1.msra.mxu0 0.0
  %1402 = vmatprep.subr.mxu0 0.0
  %1403 = vmatpush1.msra.mxu0 0.0
  %1404 = vmatprep.subr.mxu0 0.0
  %1405 = vmatpush1.msra.mxu0 0.0
  %1406 = vmatprep.subr.mxu0 0.0
  %1407 = vmatpush1.msra.mxu0 0.0
  %1408 = vmatprep.mubr.f32.mxu0 0.0
  %v1409 = vand.u32 %v906, 4294901760
  %v1410 = vsub.f32 %v906, %v1409
  %v1411 = vand.u32 %v1410, 4294901760
  %1412 = vmatmul.mubr.f32.gmra.mrb[0].mxu0 %v1411
  %v1413 = vpop.f32.mrb[0].mxu0
  %v1414 = vadd.f32 %v1288, %v1413
  %v1415 = vpop.f32.mrb[0].mxu0
  %1416 = vmatprep.mubr.f32.mxu0 0.0
  %v1417 = vand.u32 %v909, 4294901760
  %v1418 = vsub.f32 %v909, %v1417
  %v1419 = vand.u32 %v1418, 4294901760
  %1420 = vmatmul.mubr.f32.gmra.mrb[0].mxu0 %v1419
  %v1421 = vpop.f32.mrb[0].mxu0
  %v1422 = vadd.f32 %v1295, %v1421
  %v1423 = vpop.f32.mrb[0].mxu0
  %1424 = vmatprep.mubr.f32.mxu0 0.0
  %v1425 = vand.u32 %v912, 4294901760
  %v1426 = vsub.f32 %v912, %v1425
  %v1427 = vand.u32 %v1426, 4294901760
  %1428 = vmatmul.mubr.f32.gmra.mrb[0].mxu0 %v1427
  %v1429 = vpop.f32.mrb[0].mxu0
  %v1430 = vadd.f32 %v1302, %v1429
  %v1431 = vpop.f32.mrb[0].mxu0
  %1432 = vmatprep.mubr.f32.mxu0 0.0
  %v1433 = vand.u32 %v915, 4294901760
  %v1434 = vsub.f32 %v915, %v1433
  %v1435 = vand.u32 %v1434, 4294901760
  %1436 = vmatmul.mubr.f32.gmra.mrb[0].mxu0 %v1435
  %v1437 = vpop.f32.mrb[0].mxu0
  %v1438 = vadd.f32 %v1309, %v1437
  %v1439 = vpop.f32.mrb[0].mxu0
  %1440 = vmatprep.mubr.f32.mxu0 0.0
  %v1441 = vand.u32 %v918, 4294901760
  %v1442 = vsub.f32 %v918, %v1441
  %v1443 = vand.u32 %v1442, 4294901760
  %1444 = vmatmul.mubr.f32.gmra.mrb[0].mxu0 %v1443
  %v1445 = vpop.f32.mrb[0].mxu0
  %v1446 = vadd.f32 %v1316, %v1445
  %v1447 = vpop.f32.mrb[0].mxu0
  %1448 = vmatprep.mubr.f32.mxu0 0.0
  %v1449 = vand.u32 %v921, 4294901760
  %v1450 = vsub.f32 %v921, %v1449
  %v1451 = vand.u32 %v1450, 4294901760
  %1452 = vmatmul.mubr.f32.gmra.mrb[0].mxu0 %v1451
  %v1453 = vpop.f32.mrb[0].mxu0
  %v1454 = vadd.f32 %v1323, %v1453
  %v1455 = vpop.f32.mrb[0].mxu0
  %1456 = vmatprep.mubr.f32.mxu0 0.0
  %v1457 = vand.u32 %v924, 4294901760
  %v1458 = vsub.f32 %v924, %v1457
  %v1459 = vand.u32 %v1458, 4294901760
  %1460 = vmatmul.mubr.f32.gmra.mrb[0].mxu0 %v1459
  %v1461 = vpop.f32.mrb[0].mxu0
  %v1462 = vadd.f32 %v1330, %v1461
  %v1463 = vpop.f32.mrb[0].mxu0
  %1464 = vmatprep.mubr.f32.mxu0 0.0
  %v1465 = vand.u32 %v927, 4294901760
  %v1466 = vsub.f32 %v927, %v1465
  %v1467 = vand.u32 %v1466, 4294901760
  %1468 = vmatmul.mubr.f32.gmra.mrb[0].mxu0 %v1467
  %v1469 = vpop.f32.mrb[0].mxu0
  %v1470 = vadd.f32 %v1337, %v1469
  %v1471 = vpop.f32.mrb[0].mxu0
  %1472 = vdwg.mxu0
  %1473 = vmatprep.subr.mxu0 0.0
  %v1474 = vand.u32 %v894, 4294901760
  %v1475 = vsub.f32 %v894, %v1474
  %v1476 = vand.u32 %v1475, 4294901760
  %1477 = vmatpush1.msra.mxu0 %v1476
  %1478 = vmatprep.subr.mxu0 0.0
  %v1479 = vand.u32 %v895, 4294901760
  %v1480 = vsub.f32 %v895, %v1479
  %v1481 = vand.u32 %v1480, 4294901760
  %1482 = vmatpush1.msra.mxu0 %v1481
  %1483 = vmatprep.subr.mxu0 0.0
  %v1484 = vand.u32 %v896, 4294901760
  %v1485 = vsub.f32 %v896, %v1484
  %v1486 = vand.u32 %v1485, 4294901760
  %1487 = vmatpush1.msra.mxu0 %v1486
  %1488 = vmatprep.subr.mxu0 0.0
  %v1489 = vand.u32 %v897, 4294901760
  %v1490 = vsub.f32 %v897, %v1489
  %v1491 = vand.u32 %v1490, 4294901760
  %1492 = vmatpush1.msra.mxu0 %v1491
  %1493 = vmatprep.subr.mxu0 0.0
  %1494 = vmatpush1.msra.mxu0 0.0
  %1495 = vmatprep.subr.mxu0 0.0
  %1496 = vmatpush1.msra.mxu0 0.0
  %1497 = vmatprep.subr.mxu0 0.0
  %1498 = vmatpush1.msra.mxu0 0.0
  %1499 = vmatprep.subr.mxu0 0.0
  %1500 = vmatpush1.msra.mxu0 0.0
  %1501 = vmatprep.subr.mxu0 0.0
  %1502 = vmatpush1.msra.mxu0 0.0
  %1503 = vmatprep.subr.mxu0 0.0
  %1504 = vmatpush1.msra.mxu0 0.0
  %1505 = vmatprep.subr.mxu0 0.0
  %1506 = vmatpush1.msra.mxu0 0.0
  %1507 = vmatprep.subr.mxu0 0.0
  %1508 = vmatpush1.msra.mxu0 0.0
  %1509 = vmatprep.subr.mxu0 0.0
  %1510 = vmatpush1.msra.mxu0 0.0
  %1511 = vmatprep.subr.mxu0 0.0
  %1512 = vmatpush1.msra.mxu0 0.0
  %1513 = vmatprep.subr.mxu0 0.0
  %1514 = vmatpush1.msra.mxu0 0.0
  %1515 = vmatprep.subr.mxu0 0.0
  %1516 = vmatpush1.msra.mxu0 0.0
  %1517 = vmatprep.subr.mxu0 0.0
  %1518 = vmatpush1.msra.mxu0 0.0
  %1519 = vmatprep.subr.mxu0 0.0
  %1520 = vmatpush1.msra.mxu0 0.0
  %1521 = vmatprep.subr.mxu0 0.0
  %1522 = vmatpush1.msra.mxu0 0.0
  %1523 = vmatprep.subr.mxu0 0.0
  %1524 = vmatpush1.msra.mxu0 0.0
  %1525 = vmatprep.subr.mxu0 0.0
  %1526 = vmatpush1.msra.mxu0 0.0
  %1527 = vmatprep.subr.mxu0 0.0
  %1528 = vmatpush1.msra.mxu0 0.0
  %1529 = vmatprep.subr.mxu0 0.0
  %1530 = vmatpush1.msra.mxu0 0.0
  %1531 = vmatprep.subr.mxu0 0.0
  %1532 = vmatpush1.msra.mxu0 0.0
  %1533 = vmatprep.subr.mxu0 0.0
  %1534 = vmatpush1.msra.mxu0 0.0
  %1535 = vmatprep.subr.mxu0 0.0
  %1536 = vmatpush1.msra.mxu0 0.0
  %1537 = vmatprep.subr.mxu0 0.0
  %1538 = vmatpush1.msra.mxu0 0.0
  %1539 = vmatprep.subr.mxu0 0.0
  %1540 = vmatpush1.msra.mxu0 0.0
  %1541 = vmatprep.subr.mxu0 0.0
  %1542 = vmatpush1.msra.mxu0 0.0
  %1543 = vmatprep.subr.mxu0 0.0
  %1544 = vmatpush1.msra.mxu0 0.0
  %1545 = vmatprep.subr.mxu0 0.0
  %1546 = vmatpush1.msra.mxu0 0.0
  %1547 = vmatprep.subr.mxu0 0.0
  %1548 = vmatpush1.msra.mxu0 0.0
  %1549 = vmatprep.mubr.f32.mxu0 0.0
  %v1550 = vand.u32 %v906, 4294901760
  %1551 = vmatmul.mubr.f32.gmra.mrb[0].mxu0 %v1550
  %v1552 = vpop.f32.mrb[0].mxu0
  %v1553 = vadd.f32 %v1414, %v1552
  %v1554 = vpop.f32.mrb[0].mxu0
  %1555 = vmatprep.mubr.f32.mxu0 0.0
  %v1556 = vand.u32 %v909, 4294901760
  %1557 = vmatmul.mubr.f32.gmra.mrb[0].mxu0 %v1556
  %v1558 = vpop.f32.mrb[0].mxu0
  %v1559 = vadd.f32 %v1422, %v1558
  %v1560 = vpop.f32.mrb[0].mxu0
  %1561 = vmatprep.mubr.f32.mxu0 0.0
  %v1562 = vand.u32 %v912, 4294901760
  %1563 = vmatmul.mubr.f32.gmra.mrb[0].mxu0 %v1562
  %v1564 = vpop.f32.mrb[0].mxu0
  %v1565 = vadd.f32 %v1430, %v1564
  %v1566 = vpop.f32.mrb[0].mxu0
  %1567 = vmatprep.mubr.f32.mxu0 0.0
  %v1568 = vand.u32 %v915, 4294901760
  %1569 = vmatmul.mubr.f32.gmra.mrb[0].mxu0 %v1568
  %v1570 = vpop.f32.mrb[0].mxu0
  %v1571 = vadd.f32 %v1438, %v1570
  %v1572 = vpop.f32.mrb[0].mxu0
  %1573 = vmatprep.mubr.f32.mxu0 0.0
  %v1574 = vand.u32 %v918, 4294901760
  %1575 = vmatmul.mubr.f32.gmra.mrb[0].mxu0 %v1574
  %v1576 = vpop.f32.mrb[0].mxu0
  %v1577 = vadd.f32 %v1446, %v1576
  %v1578 = vpop.f32.mrb[0].mxu0
  %1579 = vmatprep.mubr.f32.mxu0 0.0
  %v1580 = vand.u32 %v921, 4294901760
  %1581 = vmatmul.mubr.f32.gmra.mrb[0].mxu0 %v1580
  %v1582 = vpop.f32.mrb[0].mxu0
  %v1583 = vadd.f32 %v1454, %v1582
  %v1584 = vpop.f32.mrb[0].mxu0
  %1585 = vmatprep.mubr.f32.mxu0 0.0
  %v1586 = vand.u32 %v924, 4294901760
  %1587 = vmatmul.mubr.f32.gmra.mrb[0].mxu0 %v1586
  %v1588 = vpop.f32.mrb[0].mxu0
  %v1589 = vadd.f32 %v1462, %v1588
  %v1590 = vpop.f32.mrb[0].mxu0
  %1591 = vmatprep.mubr.f32.mxu0 0.0
  %v1592 = vand.u32 %v927, 4294901760
  %1593 = vmatmul.mubr.f32.gmra.mrb[0].mxu0 %v1592
  %v1594 = vpop.f32.mrb[0].mxu0
  %v1595 = vadd.f32 %v1470, %v1594
  %v1596 = vpop.f32.mrb[0].mxu0
  %1597 = vdwg.mxu0
  %1598 = vmatprep.subr.mxu0 0.0
  %v1599 = vand.u32 %v894, 4294901760
  %1600 = vmatpush1.msra.mxu0 %v1599
  %1601 = vmatprep.subr.mxu0 0.0
  %v1602 = vand.u32 %v895, 4294901760
  %1603 = vmatpush1.msra.mxu0 %v1602
  %1604 = vmatprep.subr.mxu0 0.0
  %v1605 = vand.u32 %v896, 4294901760
  %1606 = vmatpush1.msra.mxu0 %v1605
  %1607 = vmatprep.subr.mxu0 0.0
  %v1608 = vand.u32 %v897, 4294901760
  %1609 = vmatpush1.msra.mxu0 %v1608
  %1610 = vmatprep.subr.mxu0 0.0
  %1611 = vmatpush1.msra.mxu0 0.0
  %1612 = vmatprep.subr.mxu0 0.0
  %1613 = vmatpush1.msra.mxu0 0.0
  %1614 = vmatprep.subr.mxu0 0.0
  %1615 = vmatpush1.msra.mxu0 0.0
  %1616 = vmatprep.subr.mxu0 0.0
  %1617 = vmatpush1.msra.mxu0 0.0
  %1618 = vmatprep.subr.mxu0 0.0
  %1619 = vmatpush1.msra.mxu0 0.0
  %1620 = vmatprep.subr.mxu0 0.0
  %1621 = vmatpush1.msra.mxu0 0.0
  %1622 = vmatprep.subr.mxu0 0.0
  %1623 = vmatpush1.msra.mxu0 0.0
  %1624 = vmatprep.subr.mxu0 0.0
  %1625 = vmatpush1.msra.mxu0 0.0
  %1626 = vmatprep.subr.mxu0 0.0
  %1627 = vmatpush1.msra.mxu0 0.0
  %1628 = vmatprep.subr.mxu0 0.0
  %1629 = vmatpush1.msra.mxu0 0.0
  %1630 = vmatprep.subr.mxu0 0.0
  %1631 = vmatpush1.msra.mxu0 0.0
  %1632 = vmatprep.subr.mxu0 0.0
  %1633 = vmatpush1.msra.mxu0 0.0
  %1634 = vmatprep.subr.mxu0 0.0
  %1635 = vmatpush1.msra.mxu0 0.0
  %1636 = vmatprep.subr.mxu0 0.0
  %1637 = vmatpush1.msra.mxu0 0.0
  %1638 = vmatprep.subr.mxu0 0.0
  %1639 = vmatpush1.msra.mxu0 0.0
  %1640 = vmatprep.subr.mxu0 0.0
  %1641 = vmatpush1.msra.mxu0 0.0
  %1642 = vmatprep.subr.mxu0 0.0
  %1643 = vmatpush1.msra.mxu0 0.0
  %1644 = vmatprep.subr.mxu0 0.0
  %1645 = vmatpush1.msra.mxu0 0.0
  %1646 = vmatprep.subr.mxu0 0.0
  %1647 = vmatpush1.msra.mxu0 0.0
  %1648 = vmatprep.subr.mxu0 0.0
  %1649 = vmatpush1.msra.mxu0 0.0
  %1650 = vmatprep.subr.mxu0 0.0
  %1651 = vmatpush1.msra.mxu0 0.0
  %1652 = vmatprep.subr.mxu0 0.0
  %1653 = vmatpush1.msra.mxu0 0.0
  %1654 = vmatprep.subr.mxu0 0.0
  %1655 = vmatpush1.msra.mxu0 0.0
  %1656 = vmatprep.subr.mxu0 0.0
  %1657 = vmatpush1.msra.mxu0 0.0
  %1658 = vmatprep.subr.mxu0 0.0
  %1659 = vmatpush1.msra.mxu0 0.0
  %1660 = vmatprep.subr.mxu0 0.0
  %1661 = vmatpush1.msra.mxu0 0.0
  %1662 = vmatprep.subr.mxu0 0.0
  %1663 = vmatpush1.msra.mxu0 0.0
  %1664 = vmatprep.subr.mxu0 0.0
  %1665 = vmatpush1.msra.mxu0 0.0
  %1666 = vmatprep.mubr.f32.mxu0 0.0
  %v1667 = vand.u32 %v906, 4294901760
  %1668 = vmatmul.mubr.f32.gmra.mrb[0].mxu0 %v1667
  %v1669 = vpop.f32.mrb[0].mxu0
  %v1670 = vadd.f32 %v1553, %v1669
  %v1671 = vpop.f32.mrb[0].mxu0
  %1672 = vmatprep.mubr.f32.mxu0 0.0
  %v1673 = vand.u32 %v909, 4294901760
  %1674 = vmatmul.mubr.f32.gmra.mrb[0].mxu0 %v1673
  %v1675 = vpop.f32.mrb[0].mxu0
  %v1676 = vadd.f32 %v1559, %v1675
  %v1677 = vpop.f32.mrb[0].mxu0
  %1678 = vmatprep.mubr.f32.mxu0 0.0
  %v1679 = vand.u32 %v912, 4294901760
  %1680 = vmatmul.mubr.f32.gmra.mrb[0].mxu0 %v1679
  %v1681 = vpop.f32.mrb[0].mxu0
  %v1682 = vadd.f32 %v1565, %v1681
  %v1683 = vpop.f32.mrb[0].mxu0
  %1684 = vmatprep.mubr.f32.mxu0 0.0
  %v1685 = vand.u32 %v915, 4294901760
  %1686 = vmatmul.mubr.f32.gmra.mrb[0].mxu0 %v1685
  %v1687 = vpop.f32.mrb[0].mxu0
  %v1688 = vadd.f32 %v1571, %v1687
  %v1689 = vpop.f32.mrb[0].mxu0
  %1690 = vmatprep.mubr.f32.mxu0 0.0
  %v1691 = vand.u32 %v918, 4294901760
  %1692 = vmatmul.mubr.f32.gmra.mrb[0].mxu0 %v1691
  %v1693 = vpop.f32.mrb[0].mxu0
  %v1694 = vadd.f32 %v1577, %v1693
  %v1695 = vpop.f32.mrb[0].mxu0
  %1696 = vmatprep.mubr.f32.mxu0 0.0
  %v1697 = vand.u32 %v921, 4294901760
  %1698 = vmatmul.mubr.f32.gmra.mrb[0].mxu0 %v1697
  %v1699 = vpop.f32.mrb[0].mxu0
  %v1700 = vadd.f32 %v1583, %v1699
  %v1701 = vpop.f32.mrb[0].mxu0
  %1702 = vmatprep.mubr.f32.mxu0 0.0
  %v1703 = vand.u32 %v924, 4294901760
  %1704 = vmatmul.mubr.f32.gmra.mrb[0].mxu0 %v1703
  %v1705 = vpop.f32.mrb[0].mxu0
  %v1706 = vadd.f32 %v1589, %v1705
  %v1707 = vpop.f32.mrb[0].mxu0
  %1708 = vmatprep.mubr.f32.mxu0 0.0
  %v1709 = vand.u32 %v927, 4294901760
  %1710 = vmatmul.mubr.f32.gmra.mrb[0].mxu0 %v1709
  %v1711 = vpop.f32.mrb[0].mxu0
  %v1712 = vadd.f32 %v1595, %v1711
  %v1713 = vpop.f32.mrb[0].mxu0
  %1714 = vdwg.mxu0
  %v1715 = vadd.f32 %v26, %v1670
  %v1716 = vadd.f32 %v27, %v1676
  %v1717 = vadd.f32 %v28, %v1682
  %v1718 = vadd.f32 %v29, %v1688
  %v1719 = vadd.f32 %v30, %v1694
  %v1720 = vadd.f32 %v31, %v1700
  %v1721 = vadd.f32 %v32, %v1706
  %v1722 = vadd.f32 %v33, %v1712
  %1723 = vst.msk [vmem:[%s7] sm:$0xff] %vm45, %v1715
  %1724 = vst.msk [vmem:[%s7 + $0x8] sm:$0xff] %vm45, %v1716
  %1725 = vst.msk [vmem:[%s7 + $0x10] sm:$0xff] %vm45, %v1717
  %1726 = vst.msk [vmem:[%s7 + $0x18] sm:$0xff] %vm45, %v1718
  %1727 = vst.msk [vmem:[%s7 + $0x20] sm:$0xff] %vm45, %v1719
  %1728 = vst.msk [vmem:[%s7 + $0x28] sm:$0xff] %vm45, %v1720
  %1729 = vst.msk [vmem:[%s7 + $0x30] sm:$0xff] %vm45, %v1721
  %1730 = vst.msk [vmem:[%s7 + $0x38] sm:$0xff] %vm45, %v1722
  // Predicated region
  $region30: #{tpu_custom_call.1} parent=0 // pred_check
    _
  $region31: #{tpu_custom_call.1} parent=0 // pred_check_branch
    %1732 = sbr.rel (0) target = $region33
  $region32: #{tpu_custom_call.1} parent=0 // pred_region
    _
  $region33: #{tpu_custom_call.1} parent=0 // pred_fallthru
    _
  // Predicated region
  $region34: #{tpu_custom_call.1} parent=0 // pred_check
    _
  $region35: #{tpu_custom_call.1} parent=0 // pred_check_branch
    %1734 = sbr.rel (0) target = $region37
  $region36: #{tpu_custom_call.1} parent=0 // pred_region
    _
  $region37: #{tpu_custom_call.1} parent=0 // pred_fallthru
    _

</llo_original>
